<compile_context>
chip_gen: v5e
topology: v5e:2x2
jax: 0.10.0
libtpu: 0.0.40
codegen_flags: <defaults>
</compile_context>

<pallas_src>
import functools

import jax
import jax.numpy as jnp
from jax.experimental import pallas as pl
from jax.experimental.pallas import tpu as pltpu

# TODO(synk): the roberta.model transformer encoder (frozen feature extractor)
# has no clean single-kernel Pallas equivalent here; the kernel starts from its
# inner_states[-2] activations.

HIDDEN = 1024
FC1_OUT = 512
NUM_CLASSES = 2
OUT_PAD = 128          # lane-dense padded output width (multiple of 128)
BN_EPS = 1e-5


def _net_head_kernel(h_ref, w1_ref, gamma_ref, beta_ref, w2_ref, b2_ref,
                     out_ref, sum_ref, *, inv_t):
    t = pl.program_id(0)

    @pl.when(t == 0)
    def _():
        sum_ref[...] = jnp.zeros_like(sum_ref)

    # Running token sum, accumulated in f32 (the h tile arrives as bf16).
    sum_ref[...] += jnp.sum(h_ref[...].astype(jnp.float32), axis=1)

    @pl.when(t == pl.num_programs(0) - 1)
    def _():
        # mean pool == running sum * (1/T)
        emb = sum_ref[...] * inv_t                               # [B, 1024] f32

        # fc1 on the MXU in bf16 with f32 accumulation.
        # (fc1 bias omitted: BatchNorm's mean subtraction cancels it exactly.)
        z1 = jnp.dot(emb.astype(jnp.bfloat16), w1_ref[...],
                     preferred_element_type=jnp.float32)         # [B, 512]

        # BatchNorm1d, training-mode batch statistics (biased variance), f32.
        mu = jnp.mean(z1, axis=0, keepdims=True)                 # [1, 512]
        d = z1 - mu
        var = jnp.mean(d * d, axis=0, keepdims=True)             # [1, 512]
        bn = d * jax.lax.rsqrt(var + BN_EPS) * gamma_ref[...] + beta_ref[...]

        # ReLU
        a = jnp.maximum(bn, 0.0)                                 # [B, 512] f32

        # fc2 into a lane-dense (B, 128) slab; real logits live in cols [:2].
        out_ref[...] = (jnp.dot(a, w2_ref[...],
                                preferred_element_type=jnp.float32)
                        + b2_ref[...])                           # [B, 128]


def _choose_tile_t(T, max_tile=512):
    """Largest T-tile <= max_tile that divides T (multiple of 8 if tiling)."""
    if T <= max_tile:
        return T
    for tt in range(max_tile - (max_tile % 8), 7, -8):
        if T % tt == 0:
            return tt
    return T  # fall back: single full-axis block


def net_head(hidden_states, w1, b1, gamma, beta, w2, b2, *, tile_t=None):
    """hidden_states: [B, T, 1024] float32 -> logits [B, 2] float32.

    b1 is accepted for parameter parity with nn.Linear but is mathematically a
    no-op before training-mode BatchNorm, so it is not fed to the kernel.
    """
    del b1
    B, T, C = hidden_states.shape
    assert C == HIDDEN

    if tile_t is None:
        tile_t = _choose_tile_t(T)
    if T % tile_t != 0:
        tile_t = T
    grid = (T // tile_t,)

    # bf16 for the big DMAs / MXU operands.
    h_bf16 = hidden_states.astype(jnp.bfloat16)
    w1_bf16 = w1.astype(jnp.bfloat16)

    # Zero-pad fc2 to a lane-dense 128-wide output slab (kept f32: it is tiny
    # and the second matmul's LHS is the f32 BN/ReLU output).
    w2_pad = jnp.zeros((FC1_OUT, OUT_PAD), jnp.float32).at[:, :NUM_CLASSES].set(
        w2.astype(jnp.float32))
    b2_pad = jnp.zeros((1, OUT_PAD), jnp.float32).at[0, :NUM_CLASSES].set(
        b2.astype(jnp.float32))

    kernel = functools.partial(_net_head_kernel, inv_t=1.0 / T)

    out_pad = pl.pallas_call(
        kernel,
        out_shape=jax.ShapeDtypeStruct((B, OUT_PAD), jnp.float32),
        grid_spec=pltpu.PrefetchScalarGridSpec(
            num_scalar_prefetch=0,
            grid=grid,
            in_specs=[
                # activations: tiled over T, double-buffered by BlockSpec
                pl.BlockSpec((B, tile_t, HIDDEN), lambda t: (0, t, 0)),
                # weights / BN params: constant block index -> VMEM-resident
                pl.BlockSpec((HIDDEN, FC1_OUT), lambda t: (0, 0)),
                pl.BlockSpec((1, FC1_OUT), lambda t: (0, 0)),
                pl.BlockSpec((1, FC1_OUT), lambda t: (0, 0)),
                pl.BlockSpec((FC1_OUT, OUT_PAD), lambda t: (0, 0)),
                pl.BlockSpec((1, OUT_PAD), lambda t: (0, 0)),
            ],
            out_specs=pl.BlockSpec((B, OUT_PAD), lambda t: (0, 0)),
            scratch_shapes=[pltpu.VMEM((B, HIDDEN), jnp.float32)],
        ),
        compiler_params=pltpu.CompilerParams(
            dimension_semantics=("arbitrary",)),  # T axis is a reduction
    )(h_bf16, w1_bf16,
      gamma.reshape(1, FC1_OUT).astype(jnp.float32),
      beta.reshape(1, FC1_OUT).astype(jnp.float32),
      w2_pad, b2_pad)

    return out_pad[:, :NUM_CLASSES]


def _reference(hidden_states, w1, b1, gamma, beta, w2, b2):
    emb = jnp.mean(hidden_states, axis=1)
    z1 = emb @ w1 + b1
    mu = jnp.mean(z1, axis=0, keepdims=True)
    var = jnp.mean((z1 - mu) ** 2, axis=0, keepdims=True)
    a = jnp.maximum((z1 - mu) / jnp.sqrt(var + BN_EPS) * gamma + beta, 0.0)
    return a @ w2 + b2


if __name__ == "__main__":
    key = jax.random.PRNGKey(0)
    k_h, k_w1, k_b1, k_g, k_bt, k_w2, k_b2 = jax.random.split(key, 7)

    B, T = 4, 16  # 4 sentences, 16 tokens each (small; exercises 2 T-tiles)

    # "inner_states[-2]" activations for each sentence, stacked: [B, T, 1024]
    hidden_states = jax.random.normal(k_h, (B, T, HIDDEN), dtype=jnp.float32)

    # Deterministic parameter init (shapes from nn.Linear / nn.BatchNorm1d).
    # Weights stored as [in, out] (transposed vs. PyTorch's [out, in]).
    w1 = jax.random.normal(k_w1, (HIDDEN, FC1_OUT), dtype=jnp.float32) * 0.02
    b1 = jax.random.normal(k_b1, (FC1_OUT,), dtype=jnp.float32) * 0.02
    gamma = jnp.ones((FC1_OUT,), jnp.float32) + \
        0.1 * jax.random.normal(k_g, (FC1_OUT,), dtype=jnp.float32)
    beta = 0.1 * jax.random.normal(k_bt, (FC1_OUT,), dtype=jnp.float32)
    w2 = jax.random.normal(k_w2, (FC1_OUT, NUM_CLASSES), dtype=jnp.float32) * 0.02
    b2 = jax.random.normal(k_b2, (NUM_CLASSES,), dtype=jnp.float32) * 0.02

    out = net_head(hidden_states, w1, b1, gamma, beta, w2, b2, tile_t=8)
    out = jax.block_until_ready(out)

    ref = _reference(hidden_states, w1, b1, gamma, beta, w2, b2)
    assert out.shape == (B, NUM_CLASSES)
    # bf16 MXU operands for fc1 -> slightly looser tolerance vs. pure-f32 ref.
    assert jnp.allclose(out, ref, atol=2e-2, rtol=2e-2), "mismatch vs reference"

    print("KERNEL_OK")
</pallas_src>

<mosaic_0001>
module attributes {stable_mosaic.version = 11 : i64} {
  func.func @_net_head_kernel(%arg0: i32, %arg1: memref<4x8x1024xbf16, #tpu.memory_space<vmem>>, %arg2: memref<1024x512xbf16, #tpu.memory_space<vmem>>, %arg3: memref<1x512xf32, #tpu.memory_space<vmem>>, %arg4: memref<1x512xf32, #tpu.memory_space<vmem>>, %arg5: memref<512x128xf32, #tpu.memory_space<vmem>>, %arg6: memref<1x128xf32, #tpu.memory_space<vmem>>, %arg7: memref<4x128xf32, #tpu.memory_space<vmem>>, %arg8: memref<4x1024xf32, #tpu.memory_space<vmem>>) attributes {dimension_semantics = [#tpu.dimension_semantics<arbitrary>], iteration_bounds = array<i64: 2>, scalar_prefetch = 0 : i64, scratch_operands = 1 : i64, tpu.core_type = #tpu.core_type<tc>, window_params = [{transform_indices = @transform_0, window_bounds = array<i64: 4, 8, 1024>}, {pipeline_mode = #tpu.pipeline_mode<synchronous>, transform_indices = @transform_1, window_bounds = array<i64: 1024, 512>}, {pipeline_mode = #tpu.pipeline_mode<synchronous>, transform_indices = @transform_2, window_bounds = array<i64: 1, 512>}, {pipeline_mode = #tpu.pipeline_mode<synchronous>, transform_indices = @transform_3, window_bounds = array<i64: 1, 512>}, {pipeline_mode = #tpu.pipeline_mode<synchronous>, transform_indices = @transform_4, window_bounds = array<i64: 512, 128>}, {pipeline_mode = #tpu.pipeline_mode<synchronous>, transform_indices = @transform_5, window_bounds = array<i64: 1, 128>}, {pipeline_mode = #tpu.pipeline_mode<synchronous>, transform_indices = @transform_6, window_bounds = array<i64: 4, 128>}]} {
    %c0_i32 = arith.constant 0 : i32
    %0 = arith.cmpi eq, %arg0, %c0_i32 : i32
    %1 = arith.extui %0 : i1 to i32
    %c0_i32_0 = arith.constant 0 : i32
    %2 = arith.cmpi ne, %1, %c0_i32_0 : i32
    scf.if %2 {
      %cst_8 = arith.constant 0.000000e+00 : f32
      %12 = vector.broadcast %cst_8 : f32 to vector<4x1024xf32>
      %c0_9 = arith.constant 0 : index
      %c0_10 = arith.constant 0 : index
      %13 = vector.load %arg8[%c0_9, %c0_10] : memref<4x1024xf32, #tpu.memory_space<vmem>>, vector<4x1024xf32>
      tpu.vector_store %arg8[%c0_9, %c0_10], %12 {strides = array<i32>} : memref<4x1024xf32, #tpu.memory_space<vmem>>, vector<4x1024xf32>,
    } else {
    }
    %c0 = arith.constant 0 : index
    %c0_1 = arith.constant 0 : index
    %3 = vector.load %arg8[%c0, %c0_1] : memref<4x1024xf32, #tpu.memory_space<vmem>>, vector<4x1024xf32>
    %c0_2 = arith.constant 0 : index
    %c0_3 = arith.constant 0 : index
    %c0_4 = arith.constant 0 : index
    %4 = vector.load %arg1[%c0_2, %c0_3, %c0_4] : memref<4x8x1024xbf16, #tpu.memory_space<vmem>>, vector<4x8x1024xbf16>
    %5 = arith.extf %4 : vector<4x8x1024xbf16> to vector<4x8x1024xf32>
    %cst = arith.constant dense<0.000000e+00> : vector<4x1024xf32>
    %6 = vector.multi_reduction <add>, %5, %cst [1] : vector<4x8x1024xf32> to vector<4x1024xf32>
    %7 = arith.addf %3, %6 : vector<4x1024xf32>
    %c0_5 = arith.constant 0 : index
    %c0_6 = arith.constant 0 : index
    %8 = vector.load %arg8[%c0_5, %c0_6] : memref<4x1024xf32, #tpu.memory_space<vmem>>, vector<4x1024xf32>
    tpu.vector_store %arg8[%c0_5, %c0_6], %7 {strides = array<i32>} : memref<4x1024xf32, #tpu.memory_space<vmem>>, vector<4x1024xf32>,
    %c1_i32 = arith.constant 1 : i32
    %9 = arith.cmpi eq, %arg0, %c1_i32 : i32
    %10 = arith.extui %9 : i1 to i32
    %c0_i32_7 = arith.constant 0 : i32
    %11 = arith.cmpi ne, %10, %c0_i32_7 : i32
    scf.if %11 {
      %c0_8 = arith.constant 0 : index
      %c0_9 = arith.constant 0 : index
      %12 = vector.load %arg8[%c0_8, %c0_9] : memref<4x1024xf32, #tpu.memory_space<vmem>>, vector<4x1024xf32>
      %cst_10 = arith.constant 6.250000e-02 : f32
      %13 = vector.broadcast %cst_10 : f32 to vector<4x1024xf32>
      %14 = arith.mulf %12, %13 : vector<4x1024xf32>
      %15 = arith.truncf %14 : vector<4x1024xf32> to vector<4x1024xbf16>
      %c0_11 = arith.constant 0 : index
      %c0_12 = arith.constant 0 : index
      %16 = vector.load %arg2[%c0_11, %c0_12] : memref<1024x512xbf16, #tpu.memory_space<vmem>>, vector<1024x512xbf16>
      %cst_13 = arith.constant dense<0.000000e+00> : vector<4x512xf32>
      %17 = tpu.matmul %15, %16, %cst_13 {dimension_numbers = #tpu.dot_dimension_numbers<[1], [0], [0], [1], [0, 0, 1, 1], [], []>} : vector<4x1024xbf16>, vector<1024x512xbf16>, vector<4x512xf32> -> vector<4x512xf32>
      %cst_14 = arith.constant dense<0.000000e+00> : vector<512xf32>
      %18 = vector.multi_reduction <add>, %17, %cst_14 [0] : vector<4x512xf32> to vector<512xf32>
      %19 = vector.shape_cast %18 : vector<512xf32> to vector<1x512xf32>
      %cst_15 = arith.constant 4.000000e+00 : f32
      %20 = vector.broadcast %cst_15 : f32 to vector<1x512xf32>
      %21 = arith.divf %19, %20 : vector<1x512xf32>
      %22 = vector.broadcast %21 : vector<1x512xf32> to vector<4x512xf32>
      %23 = arith.subf %17, %22 : vector<4x512xf32>
      %24 = arith.mulf %23, %23 : vector<4x512xf32>
      %cst_16 = arith.constant dense<0.000000e+00> : vector<512xf32>
      %25 = vector.multi_reduction <add>, %24, %cst_16 [0] : vector<4x512xf32> to vector<512xf32>
      %26 = vector.shape_cast %25 : vector<512xf32> to vector<1x512xf32>
      %cst_17 = arith.constant 4.000000e+00 : f32
      %27 = vector.broadcast %cst_17 : f32 to vector<1x512xf32>
      %28 = arith.divf %26, %27 : vector<1x512xf32>
      %cst_18 = arith.constant 9.99999974E-6 : f32
      %29 = vector.broadcast %cst_18 : f32 to vector<1x512xf32>
      %30 = arith.addf %28, %29 : vector<1x512xf32>
      %31 = math.rsqrt %30 : vector<1x512xf32>
      %32 = vector.broadcast %31 : vector<1x512xf32> to vector<4x512xf32>
      %33 = arith.mulf %23, %32 : vector<4x512xf32>
      %c0_19 = arith.constant 0 : index
      %c0_20 = arith.constant 0 : index
      %34 = vector.load %arg3[%c0_19, %c0_20] : memref<1x512xf32, #tpu.memory_space<vmem>>, vector<1x512xf32>
      %35 = vector.broadcast %34 : vector<1x512xf32> to vector<4x512xf32>
      %36 = arith.mulf %33, %35 : vector<4x512xf32>
      %c0_21 = arith.constant 0 : index
      %c0_22 = arith.constant 0 : index
      %37 = vector.load %arg4[%c0_21, %c0_22] : memref<1x512xf32, #tpu.memory_space<vmem>>, vector<1x512xf32>
      %38 = vector.broadcast %37 : vector<1x512xf32> to vector<4x512xf32>
      %39 = arith.addf %36, %38 : vector<4x512xf32>
      %cst_23 = arith.constant 0.000000e+00 : f32
      %40 = vector.broadcast %cst_23 : f32 to vector<4x512xf32>
      %41 = arith.maximumf %39, %40 : vector<4x512xf32>
      %c0_24 = arith.constant 0 : index
      %c0_25 = arith.constant 0 : index
      %42 = vector.load %arg5[%c0_24, %c0_25] : memref<512x128xf32, #tpu.memory_space<vmem>>, vector<512x128xf32>
      %cst_26 = arith.constant dense<0.000000e+00> : vector<4x128xf32>
      %43 = tpu.matmul %41, %42, %cst_26 {dimension_numbers = #tpu.dot_dimension_numbers<[1], [0], [0], [1], [0, 0, 1, 1], [], []>} : vector<4x512xf32>, vector<512x128xf32>, vector<4x128xf32> -> vector<4x128xf32>
      %c0_27 = arith.constant 0 : index
      %c0_28 = arith.constant 0 : index
      %44 = vector.load %arg6[%c0_27, %c0_28] : memref<1x128xf32, #tpu.memory_space<vmem>>, vector<1x128xf32>
      %45 = vector.broadcast %44 : vector<1x128xf32> to vector<4x128xf32>
      %46 = arith.addf %43, %45 : vector<4x128xf32>
      %c0_29 = arith.constant 0 : index
      %c0_30 = arith.constant 0 : index
      %47 = vector.load %arg7[%c0_29, %c0_30] : memref<4x128xf32, #tpu.memory_space<vmem>>, vector<4x128xf32>
      tpu.vector_store %arg7[%c0_29, %c0_30], %46 {strides = array<i32>} : memref<4x128xf32, #tpu.memory_space<vmem>>, vector<4x128xf32>,
    } else {
    }
    return
  }
  func.func @transform_0(%arg0: i32) -> (i32, i32, i32) {
    %c0_i32 = arith.constant 0 : i32
    %c0_i32_0 = arith.constant 0 : i32
    %c0_i32_1 = arith.constant 0 : i32
    return %c0_i32, %arg0, %c0_i32_0 : i32, i32, i32
  }
  func.func @transform_1(%arg0: i32) -> (i32, i32) {
    %c0_i32 = arith.constant 0 : i32
    %c0_i32_0 = arith.constant 0 : i32
    %c0_i32_1 = arith.constant 0 : i32
    return %c0_i32, %c0_i32_0 : i32, i32
  }
  func.func @transform_2(%arg0: i32) -> (i32, i32) {
    %c0_i32 = arith.constant 0 : i32
    %c0_i32_0 = arith.constant 0 : i32
    %c0_i32_1 = arith.constant 0 : i32
    return %c0_i32, %c0_i32_0 : i32, i32
  }
  func.func @transform_3(%arg0: i32) -> (i32, i32) {
    %c0_i32 = arith.constant 0 : i32
    %c0_i32_0 = arith.constant 0 : i32
    %c0_i32_1 = arith.constant 0 : i32
    return %c0_i32, %c0_i32_0 : i32, i32
  }
  func.func @transform_4(%arg0: i32) -> (i32, i32) {
    %c0_i32 = arith.constant 0 : i32
    %c0_i32_0 = arith.constant 0 : i32
    %c0_i32_1 = arith.constant 0 : i32
    return %c0_i32, %c0_i32_0 : i32, i32
  }
  func.func @transform_5(%arg0: i32) -> (i32, i32) {
    %c0_i32 = arith.constant 0 : i32
    %c0_i32_0 = arith.constant 0 : i32
    %c0_i32_1 = arith.constant 0 : i32
    return %c0_i32, %c0_i32_0 : i32, i32
  }
  func.func @transform_6(%arg0: i32) -> (i32, i32) {
    %c0_i32 = arith.constant 0 : i32
    %c0_i32_0 = arith.constant 0 : i32
    %c0_i32_1 = arith.constant 0 : i32
    return %c0_i32, %c0_i32_0 : i32, i32
  }
}

</mosaic_0001>

<llo_original>
// kernel: tpu_custom_call.1
$region0: #{tpu_custom_call.1}
  #allocation0 [shape = 'u32[]', space=smem, size = 0x4, offset = 0x4, fixed_abs, tag = 'smem constant byte address 0x4 - core index']
  #allocation1 [shape = 'u32[72,128]{1,0:T(1,128)}', space=vmem, size = 0x9000, scoped, tag = 'internal scratch']
  #allocation2 [shape = 'f32[4,1024]{1,0:T(4,128)}', space=vmem, size = 0x4000, scoped, tag = 'scratch operand']
  %s0 = inlined_call_operand.hbm [shape: bf16[4,16,1024], index: 0, kind: input, shape index: {}]
  %s1 = inlined_call_operand.hbm [shape: bf16[1024,512], index: 1, kind: input, shape index: {}]
  %s2 = inlined_call_operand.hbm [shape: f32[1,512], index: 2, kind: input, shape index: {}]
  %s3 = inlined_call_operand.hbm [shape: f32[1,512], index: 3, kind: input, shape index: {}]
  %s4 = inlined_call_operand.hbm [shape: f32[512,128], index: 4, kind: input, shape index: {}]
  %s5 = inlined_call_operand.vmem [shape: f32[1,128], index: 5, kind: input, shape index: {}]
  %s6 = inlined_call_operand.hbm [shape: f32[4,128], index: 6, kind: output, shape index: {}]
  %s7 = sld [smem:[#allocation0]]
  $region85: #{tpu_custom_call.1} parent=0
    _
  %s9 = ssub.s32 1, %s7
  %s10 = scalar_select 0, %s9, %s7
  $region1: #{tpu_custom_call.1} parent=0
    #allocation3 [shape = 'u8[131072]{0}', space=vmem, size = 0x20000, scoped, tag = 'input window, operand 0']
    #allocation4 [shape = 's32[2]{0}', space=sflag, size = 0x8, scoped, tag = 'scoped memory for tpu_custom_call.1']
    #allocation5 [shape = 's32[2]{0}', space=sflag, size = 0x8, scoped, tag = 'scoped memory for tpu_custom_call.1']
    #allocation6 [shape = 'u8[1048576]{0}', space=vmem, size = 0x100000, scoped, tag = 'input window, operand 1, single buffered']
    #allocation7 [shape = 's32[1]{0}', space=sflag, size = 0x4, scoped, tag = 'scoped memory for tpu_custom_call.1']
    #allocation8 [shape = 'u8[2048]{0}', space=vmem, size = 0x800, scoped, tag = 'input window, operand 2, single buffered']
    #allocation9 [shape = 'u8[2048]{0}', space=vmem, size = 0x800, scoped, tag = 'input window, operand 3, single buffered']
    #allocation10 [shape = 's32[1]{0}', space=sflag, size = 0x4, scoped, tag = 'scoped memory for tpu_custom_call.1']
    #allocation11 [shape = 'u8[262144]{0}', space=vmem, size = 0x40000, scoped, tag = 'input window, operand 4, single buffered']
    #allocation12 [shape = 'u8[2048]{0}', space=vmem, size = 0x800, scoped, tag = 'output window, operand 0, single buffered']
    %11 = vsyncpa [#allocation4], 0
    %s12 = scalar_lea.sflag [#allocation4], 1
    %13 = vsyncpa %s12, 0
    %14 = vsyncpa [#allocation7], 0
    %15 = vsyncpa [#allocation10], 0
    %16 = vsyncpa [#allocation5], 0
    loop: start=0, step=1, limit=4
    $region2: #{tpu_custom_call.1} parent=1 // loop_pre_header
      _
    $region3: #{tpu_custom_call.1} parent=1 // loop_header
      %s18 = sphi 0, %s22
      %p19 = scmp.ge.s32.totalorder %s18, 4
      %s28 = sphi 0, %s30
      %s31 = sphi 0, %s28
      %s32 = sphi 0, %s31
      %s48 = sphi 0, %s32
      %s52 = sphi 0, %s52
      %s54 = sphi 0, %s52
      %s55 = sphi 0, %s54
      %s69 = sphi 0, %s55
      %s73 = sphi 0, %s73
      %s75 = sphi 0, %s73
      %s76 = sphi 0, %s75
      %s90 = sphi 0, %s76
      %s94 = sphi 0, %s94
      %s96 = sphi 0, %s94
      %s97 = sphi 0, %s96
      %s111 = sphi 0, %s97
      %s115 = sphi 0, %s115
      %s117 = sphi 0, %s115
      %s118 = sphi 0, %s117
      %s132 = sphi 0, %s118
      %s136 = sphi 0, %s136
      %s138 = sphi 0, %s136
      %s139 = sphi 0, %s138
      %s153 = sphi 0, %s139
      %s157 = sphi 0, %s157
      %s159 = sphi 0, %s157
      %s160 = sphi 0, %s159
      %s174 = sphi 0, %s160
    $region4: #{tpu_custom_call.1} parent=1 // loop_header_branch
      %21 = sbr.rel (%p19) target = $region8
    $region5: #{tpu_custom_call.1} parent=1 // loop_body
      %s23 = ssub.s32 %s18, 1
      %s24 = ssub.s32 %s18, 2
      %s25 = sadd.s32 %s18, 1
      %s26 = ssub.s32 %s18, %s25
      %p27 = scmp.eq.s32.totalorder %s26, 0
      %s29 = sadd.s32 %s28, 1
      %s30 = scalar_select %p27, %s28, %s29
      %p33 = pneg %p27
      %p34 = scmp.eq.s32.totalorder %s18, 1
      %p35 = por %p33, %p34
      %p36 = scmp.ne.s32.totalorder %s28, %s31
      %p37 = scmp.eq.s32.totalorder %s18, 0
      %p38 = por %p36, %p37
      %p39 = scmp.ne.s32.totalorder %s28, %s31
      %p40 = scmp.eq.s32.totalorder %s23, 1
      %p41 = por %p39, %p40
      %p42 = scmp.ne.s32.totalorder %s31, %s32
      %p43 = scmp.eq.s32.totalorder %s23, 0
      %p44 = por %p42, %p43
      %p45 = scmp.ne.s32.totalorder %s31, %s32
      %p46 = scmp.eq.s32.totalorder %s24, 1
      %p47 = por %p45, %p46
      %p49 = scmp.ne.s32.totalorder %s32, %s48
      %p50 = scmp.eq.s32.totalorder %s24, 0
      %p51 = por %p49, %p50
      %s53 = sadd.s32 %s52, 1
      %p56 = scmp.eq.s32.totalorder %s18, 1
      %p57 = scmp.ne.s32.totalorder %s52, %s54
      %p58 = scmp.eq.s32.totalorder %s18, 0
      %p59 = por %p57, %p58
      %p60 = scmp.ne.s32.totalorder %s52, %s54
      %p61 = scmp.eq.s32.totalorder %s23, 1
      %p62 = por %p60, %p61
      %p63 = scmp.ne.s32.totalorder %s54, %s55
      %p64 = scmp.eq.s32.totalorder %s23, 0
      %p65 = por %p63, %p64
      %p66 = scmp.ne.s32.totalorder %s54, %s55
      %p67 = scmp.eq.s32.totalorder %s24, 1
      %p68 = por %p66, %p67
      %p70 = scmp.ne.s32.totalorder %s55, %s69
      %p71 = scmp.eq.s32.totalorder %s24, 0
      %p72 = por %p70, %p71
      %s74 = sadd.s32 %s73, 1
      %p77 = scmp.eq.s32.totalorder %s18, 1
      %p78 = scmp.ne.s32.totalorder %s73, %s75
      %p79 = scmp.eq.s32.totalorder %s18, 0
      %p80 = por %p78, %p79
      %p81 = scmp.ne.s32.totalorder %s73, %s75
      %p82 = scmp.eq.s32.totalorder %s23, 1
      %p83 = por %p81, %p82
      %p84 = scmp.ne.s32.totalorder %s75, %s76
      %p85 = scmp.eq.s32.totalorder %s23, 0
      %p86 = por %p84, %p85
      %p87 = scmp.ne.s32.totalorder %s75, %s76
      %p88 = scmp.eq.s32.totalorder %s24, 1
      %p89 = por %p87, %p88
      %p91 = scmp.ne.s32.totalorder %s76, %s90
      %p92 = scmp.eq.s32.totalorder %s24, 0
      %p93 = por %p91, %p92
      %s95 = sadd.s32 %s94, 1
      %p98 = scmp.eq.s32.totalorder %s18, 1
      %p99 = scmp.ne.s32.totalorder %s94, %s96
      %p100 = scmp.eq.s32.totalorder %s18, 0
      %p101 = por %p99, %p100
      %p102 = scmp.ne.s32.totalorder %s94, %s96
      %p103 = scmp.eq.s32.totalorder %s23, 1
      %p104 = por %p102, %p103
      %p105 = scmp.ne.s32.totalorder %s96, %s97
      %p106 = scmp.eq.s32.totalorder %s23, 0
      %p107 = por %p105, %p106
      %p108 = scmp.ne.s32.totalorder %s96, %s97
      %p109 = scmp.eq.s32.totalorder %s24, 1
      %p110 = por %p108, %p109
      %p112 = scmp.ne.s32.totalorder %s97, %s111
      %p113 = scmp.eq.s32.totalorder %s24, 0
      %p114 = por %p112, %p113
      %s116 = sadd.s32 %s115, 1
      %p119 = scmp.eq.s32.totalorder %s18, 1
      %p120 = scmp.ne.s32.totalorder %s115, %s117
      %p121 = scmp.eq.s32.totalorder %s18, 0
      %p122 = por %p120, %p121
      %p123 = scmp.ne.s32.totalorder %s115, %s117
      %p124 = scmp.eq.s32.totalorder %s23, 1
      %p125 = por %p123, %p124
      %p126 = scmp.ne.s32.totalorder %s117, %s118
      %p127 = scmp.eq.s32.totalorder %s23, 0
      %p128 = por %p126, %p127
      %p129 = scmp.ne.s32.totalorder %s117, %s118
      %p130 = scmp.eq.s32.totalorder %s24, 1
      %p131 = por %p129, %p130
      %p133 = scmp.ne.s32.totalorder %s118, %s132
      %p134 = scmp.eq.s32.totalorder %s24, 0
      %p135 = por %p133, %p134
      %s137 = sadd.s32 %s136, 1
      %p140 = scmp.eq.s32.totalorder %s18, 1
      %p141 = scmp.ne.s32.totalorder %s136, %s138
      %p142 = scmp.eq.s32.totalorder %s18, 0
      %p143 = por %p141, %p142
      %p144 = scmp.ne.s32.totalorder %s136, %s138
      %p145 = scmp.eq.s32.totalorder %s23, 1
      %p146 = por %p144, %p145
      %p147 = scmp.ne.s32.totalorder %s138, %s139
      %p148 = scmp.eq.s32.totalorder %s23, 0
      %p149 = por %p147, %p148
      %p150 = scmp.ne.s32.totalorder %s138, %s139
      %p151 = scmp.eq.s32.totalorder %s24, 1
      %p152 = por %p150, %p151
      %p154 = scmp.ne.s32.totalorder %s139, %s153
      %p155 = scmp.eq.s32.totalorder %s24, 0
      %p156 = por %p154, %p155
      %s158 = sadd.s32 %s157, 1
      %p161 = scmp.eq.s32.totalorder %s18, 1
      %p162 = scmp.ne.s32.totalorder %s157, %s159
      %p163 = scmp.eq.s32.totalorder %s18, 0
      %p164 = por %p162, %p163
      %p165 = scmp.ne.s32.totalorder %s157, %s159
      %p166 = scmp.eq.s32.totalorder %s23, 1
      %p167 = por %p165, %p166
      %p168 = scmp.ne.s32.totalorder %s159, %s160
      %p169 = scmp.eq.s32.totalorder %s23, 0
      %p170 = por %p168, %p169
      %p171 = scmp.ne.s32.totalorder %s159, %s160
      %p172 = scmp.eq.s32.totalorder %s24, 1
      %p173 = por %p171, %p172
      %p175 = scmp.ne.s32.totalorder %s160, %s174
      %p176 = scmp.eq.s32.totalorder %s24, 0
      %p177 = por %p175, %p176
      %p178 = scmp.le.s32.totalorder 1, %s18
      %p179 = scmp.lt.s32.totalorder %s18, 3
      %p180 = pnand %p178, %p179
      %p181 = pneg %p180
      // Predicated region
      $region9: #{tpu_custom_call.1} parent=5 // pred_check
        _
      $region10: #{tpu_custom_call.1} parent=5 // pred_check_branch
        %183 = sbr.rel (%p180) target = $region12
      $region11: #{tpu_custom_call.1} parent=5 // pred_region
        %s184 = ssub.s32 %s18, 1
        // Predicated region
        $region13: #{tpu_custom_call.1} parent=11 // pred_check
          %p185 = pneg %p65
        $region14: #{tpu_custom_call.1} parent=11 // pred_check_branch
          %187 = sbr.rel (%p185) target = $region16
        $region15: #{tpu_custom_call.1} parent=11 // pred_region
          %189 = vsyncadd [#allocation7], 0
          %s190 = sshll.u32 %s1, 4
          %s191 = int_to_ptr.hbm [resolvable:$true] %s190
          %s192 = sshll.u32 [#allocation6], 4
          %s193 = int_to_ptr.vmem [resolvable:$true] %s192
          %198 = dma.hbm_to_vmem [thread:$0]  %s191, 32768, %s193, [#allocation7], 256, 256, 16
        $region16: #{tpu_custom_call.1} parent=11 // pred_fallthru
          _
        // Predicated region
        $region17: #{tpu_custom_call.1} parent=11 // pred_check
          %p199 = pneg %p86
        $region18: #{tpu_custom_call.1} parent=11 // pred_check_branch
          %201 = sbr.rel (%p199) target = $region20
        $region19: #{tpu_custom_call.1} parent=11 // pred_region
          %203 = vsyncadd [#allocation7], 0
          %s205 = sshll.u32 %s2, 4
          %s206 = int_to_ptr.hbm [resolvable:$true] %s205
          %s207 = sshll.u32 [#allocation8], 4
          %s208 = int_to_ptr.vmem [resolvable:$true] %s207
          %210 = dma.hbm_to_vmem [thread:$0]  %s206, 64, %s208, [#allocation7]
        $region20: #{tpu_custom_call.1} parent=11 // pred_fallthru
          _
        // Predicated region
        $region21: #{tpu_custom_call.1} parent=11 // pred_check
          %p211 = pneg %p107
        $region22: #{tpu_custom_call.1} parent=11 // pred_check_branch
          %213 = sbr.rel (%p211) target = $region24
        $region23: #{tpu_custom_call.1} parent=11 // pred_region
          %215 = vsyncadd [#allocation10], 0
          %s217 = sshll.u32 %s3, 4
          %s218 = int_to_ptr.hbm [resolvable:$true] %s217
          %s219 = sshll.u32 [#allocation9], 4
          %s220 = int_to_ptr.vmem [resolvable:$true] %s219
          %222 = dma.hbm_to_vmem [thread:$0]  %s218, 64, %s220, [#allocation10]
        $region24: #{tpu_custom_call.1} parent=11 // pred_fallthru
          _
        // Predicated region
        $region25: #{tpu_custom_call.1} parent=11 // pred_check
          %p223 = pneg %p128
        $region26: #{tpu_custom_call.1} parent=11 // pred_check_branch
          %225 = sbr.rel (%p223) target = $region28
        $region27: #{tpu_custom_call.1} parent=11 // pred_region
          %227 = vsyncadd [#allocation10], 0
          %s228 = sshll.u32 %s4, 4
          %s229 = int_to_ptr.hbm [resolvable:$true] %s228
          %s230 = sshll.u32 [#allocation11], 4
          %s231 = int_to_ptr.vmem [resolvable:$true] %s230
          %236 = dma.hbm_to_vmem [thread:$0]  %s229, 8192, %s231, [#allocation10], 128, 128, 8
        $region28: #{tpu_custom_call.1} parent=11 // pred_fallthru
          _
        // Predicated region
        $region29: #{tpu_custom_call.1} parent=11 // pred_check
          %p237 = pneg %p149
        $region30: #{tpu_custom_call.1} parent=11 // pred_check_branch
          %239 = sbr.rel (%p237) target = $region32
        $region31: #{tpu_custom_call.1} parent=11 // pred_region
          _
        $region32: #{tpu_custom_call.1} parent=11 // pred_fallthru
          _
      $region12: #{tpu_custom_call.1} parent=5 // pred_fallthru
        _
      %p240 = scmp.lt.s32.totalorder %s18, 2
      // Predicated region
      $region33: #{tpu_custom_call.1} parent=5 // pred_check
        %p241 = pneg %p240
      $region34: #{tpu_custom_call.1} parent=5 // pred_check_branch
        %243 = sbr.rel (%p241) target = $region36
      $region35: #{tpu_custom_call.1} parent=5 // pred_region
        // Predicated region
        $region37: #{tpu_custom_call.1} parent=35 // pred_check
          %p244 = pneg %p38
        $region38: #{tpu_custom_call.1} parent=35 // pred_check_branch
          %246 = sbr.rel (%p244) target = $region40
        $region39: #{tpu_custom_call.1} parent=35 // pred_region
          %s247 = sand.u32 %s28, 1
          %s248 = scalar_lea.sflag [#allocation4], %s247
          %s249 = sand.u32 %s28, 1
          %s250 = smul.addr %s249, 128
          %s251 = scalar_lea.vmem [#allocation3], %s250
          %253 = vsyncadd %s248, 0
          %s254 = smul.addr %s18, 8
          %s255 = smul.addr %s254, 4
          %s256 = scalar_lea.hbm %s0, %s255
          %s257 = sshll.u32 %s256, 4
          %s258 = int_to_ptr.hbm [resolvable:$true] %s257
          %s259 = sshll.u32 %s251, 4
          %s260 = int_to_ptr.vmem [resolvable:$true] %s259
          %265 = dma.hbm_to_vmem [thread:$0]  %s258, 2048, %s260, %s248, 1024, 512, 32
        $region40: #{tpu_custom_call.1} parent=35 // pred_fallthru
          _
      $region36: #{tpu_custom_call.1} parent=5 // pred_fallthru
        _
      %p266 = scmp.le.s32.totalorder 1, %s18
      %p267 = scmp.lt.s32.totalorder %s18, 3
      %p268 = pnand %p266, %p267
      %p269 = pneg %p268
      // Predicated region
      $region41: #{tpu_custom_call.1} parent=5 // pred_check
        _
      $region42: #{tpu_custom_call.1} parent=5 // pred_check_branch
        %271 = sbr.rel (%p268) target = $region44
      $region43: #{tpu_custom_call.1} parent=5 // pred_region
        %s272 = ssub.s32 %s18, 1
        %s273 = sand.u32 %s31, 1
        %s274 = scalar_lea.sflag [#allocation4], %s273
        %s275 = sand.u32 %s31, 1
        %s276 = smul.addr %s275, 128
        %s277 = scalar_lea.vmem [#allocation3], %s276
        // Predicated region
        $region45: #{tpu_custom_call.1} parent=43 // pred_check
          %p278 = pneg %p44
        $region46: #{tpu_custom_call.1} parent=43 // pred_check_branch
          %280 = sbr.rel (%p278) target = $region48
        $region47: #{tpu_custom_call.1} parent=43 // pred_region
          %282 = dma.done %s274, 2048
        $region48: #{tpu_custom_call.1} parent=43 // pred_fallthru
          _
        // Predicated region
        $region49: #{tpu_custom_call.1} parent=43 // pred_check
          %p283 = pneg %p65
        $region50: #{tpu_custom_call.1} parent=43 // pred_check_branch
          %285 = sbr.rel (%p283) target = $region52
        $region51: #{tpu_custom_call.1} parent=43 // pred_region
          %287 = dma.done [#allocation7], 32768
        $region52: #{tpu_custom_call.1} parent=43 // pred_fallthru
          _
        // Predicated region
        $region53: #{tpu_custom_call.1} parent=43 // pred_check
          %p288 = pneg %p86
        $region54: #{tpu_custom_call.1} parent=43 // pred_check_branch
          %290 = sbr.rel (%p288) target = $region56
        $region55: #{tpu_custom_call.1} parent=43 // pred_region
          %292 = dma.done [#allocation7], 64
        $region56: #{tpu_custom_call.1} parent=43 // pred_fallthru
          _
        // Predicated region
        $region57: #{tpu_custom_call.1} parent=43 // pred_check
          %p293 = pneg %p107
        $region58: #{tpu_custom_call.1} parent=43 // pred_check_branch
          %295 = sbr.rel (%p293) target = $region60
        $region59: #{tpu_custom_call.1} parent=43 // pred_region
          %297 = dma.done [#allocation10], 64
        $region60: #{tpu_custom_call.1} parent=43 // pred_fallthru
          _
        // Predicated region
        $region61: #{tpu_custom_call.1} parent=43 // pred_check
          %p298 = pneg %p128
        $region62: #{tpu_custom_call.1} parent=43 // pred_check_branch
          %300 = sbr.rel (%p298) target = $region64
        $region63: #{tpu_custom_call.1} parent=43 // pred_region
          %302 = dma.done [#allocation10], 8192
        $region64: #{tpu_custom_call.1} parent=43 // pred_fallthru
          _
        %s303 = sand.u32 %s31, 1
        %s304 = scalar_lea.sflag [#allocation4], %s303
        %s305 = sand.u32 %s31, 1
        %s306 = smul.addr %s305, 128
        %s307 = scalar_lea.vmem [#allocation3], %s306
        %p308 = pneg %p44
        %p309 = pneg %p41
        %p310 = pneg %p65
        %p311 = pneg %p62
        %p312 = pneg %p86
        %p313 = pneg %p83
        %p314 = pneg %p107
        %p315 = pneg %p104
        %p316 = pneg %p128
        %p317 = pneg %p125
        %p318 = pneg %p149
        %p319 = pneg %p146
        %p320 = pneg %p170
        %p321 = pneg %p167
        %p322 = scmp.eq.s32.totalorder %s23, 0
        // Predicated region
        $region65: #{tpu_custom_call.1} parent=43 // pred_check
          %p323 = pneg %p322
        $region66: #{tpu_custom_call.1} parent=43 // pred_check_branch
          %325 = sbr.rel (%p323) target = $region68
        $region67: #{tpu_custom_call.1} parent=43 // pred_region
          %326 = vst [vmem:[#allocation2] sm:$0xff] 0.0
          %327 = vst [vmem:[#allocation2 + $0x8] sm:$0xff] 0.0
          %328 = vst [vmem:[#allocation2 + $0x10] sm:$0xff] 0.0
          %329 = vst [vmem:[#allocation2 + $0x18] sm:$0xff] 0.0
        $region68: #{tpu_custom_call.1} parent=43 // pred_fallthru
          _
        %v330 = vld [vmem:[#allocation2] sm:$0xff]
        %v331 = vld [vmem:[#allocation2 + $0x8] sm:$0xff]
        %v332 = vld [vmem:[#allocation2 + $0x10] sm:$0xff]
        %v333 = vld [vmem:[#allocation2 + $0x18] sm:$0xff]
        %v334 = vld [vmem:[%s277] sm:$0xff]
        %v335 = vld [vmem:[%s277 + $0x8] sm:$0xff]
        %v336 = vld [vmem:[%s277 + $0x10] sm:$0xff]
        %v337 = vld [vmem:[%s277 + $0x18] sm:$0xff]
        %v338 = vld [vmem:[%s277 + $0x20] sm:$0xff]
        %v339 = vld [vmem:[%s277 + $0x28] sm:$0xff]
        %v340 = vld [vmem:[%s277 + $0x30] sm:$0xff]
        %v341 = vld [vmem:[%s277 + $0x38] sm:$0xff]
        %v342 = vld [vmem:[%s277 + $0x40] sm:$0xff]
        %v343 = vld [vmem:[%s277 + $0x48] sm:$0xff]
        %v344 = vld [vmem:[%s277 + $0x50] sm:$0xff]
        %v345 = vld [vmem:[%s277 + $0x58] sm:$0xff]
        %v346 = vld [vmem:[%s277 + $0x60] sm:$0xff]
        %v347 = vld [vmem:[%s277 + $0x68] sm:$0xff]
        %v348 = vld [vmem:[%s277 + $0x70] sm:$0xff]
        %v349 = vld [vmem:[%s277 + $0x78] sm:$0xff]
        %v350 = vunpack.c.l.bf16 %v334
        %v351 = vunpack.c.h.bf16 %v334
        %v352 = vunpack.c.l.bf16 %v335
        %v353 = vunpack.c.h.bf16 %v335
        %v354 = vunpack.c.l.bf16 %v336
        %v355 = vunpack.c.h.bf16 %v336
        %v356 = vunpack.c.l.bf16 %v337
        %v357 = vunpack.c.h.bf16 %v337
        %v358 = vunpack.c.l.bf16 %v338
        %v359 = vunpack.c.h.bf16 %v338
        %v360 = vunpack.c.l.bf16 %v339
        %v361 = vunpack.c.h.bf16 %v339
        %v362 = vunpack.c.l.bf16 %v340
        %v363 = vunpack.c.h.bf16 %v340
        %v364 = vunpack.c.l.bf16 %v341
        %v365 = vunpack.c.h.bf16 %v341
        %v366 = vunpack.c.l.bf16 %v342
        %v367 = vunpack.c.h.bf16 %v342
        %v368 = vunpack.c.l.bf16 %v343
        %v369 = vunpack.c.h.bf16 %v343
        %v370 = vunpack.c.l.bf16 %v344
        %v371 = vunpack.c.h.bf16 %v344
        %v372 = vunpack.c.l.bf16 %v345
        %v373 = vunpack.c.h.bf16 %v345
        %v374 = vunpack.c.l.bf16 %v346
        %v375 = vunpack.c.h.bf16 %v346
        %v376 = vunpack.c.l.bf16 %v347
        %v377 = vunpack.c.h.bf16 %v347
        %v378 = vunpack.c.l.bf16 %v348
        %v379 = vunpack.c.h.bf16 %v348
        %v380 = vunpack.c.l.bf16 %v349
        %v381 = vunpack.c.h.bf16 %v349
        %v382 = vrot.slane %v350, 4
        %v383 = vadd.f32 %v350, %v382
        %v384 = vrot.slane %v383, 2
        %v385 = vadd.f32 %v383, %v384
        %v386 = vrot.slane %v385, 1
        %v387 = vadd.f32 %v385, %v386
        %v388 = vrot.slane %v351, 4
        %v389 = vadd.f32 %v351, %v388
        %v390 = vrot.slane %v389, 2
        %v391 = vadd.f32 %v389, %v390
        %v392 = vrot.slane %v391, 1
        %v393 = vadd.f32 %v391, %v392
        %v394 = vrot.slane %v352, 4
        %v395 = vadd.f32 %v352, %v394
        %v396 = vrot.slane %v395, 2
        %v397 = vadd.f32 %v395, %v396
        %v398 = vrot.slane %v397, 1
        %v399 = vadd.f32 %v397, %v398
        %v400 = vrot.slane %v353, 4
        %v401 = vadd.f32 %v353, %v400
        %v402 = vrot.slane %v401, 2
        %v403 = vadd.f32 %v401, %v402
        %v404 = vrot.slane %v403, 1
        %v405 = vadd.f32 %v403, %v404
        %v406 = vrot.slane %v354, 4
        %v407 = vadd.f32 %v354, %v406
        %v408 = vrot.slane %v407, 2
        %v409 = vadd.f32 %v407, %v408
        %v410 = vrot.slane %v409, 1
        %v411 = vadd.f32 %v409, %v410
        %v412 = vrot.slane %v355, 4
        %v413 = vadd.f32 %v355, %v412
        %v414 = vrot.slane %v413, 2
        %v415 = vadd.f32 %v413, %v414
        %v416 = vrot.slane %v415, 1
        %v417 = vadd.f32 %v415, %v416
        %v418 = vrot.slane %v356, 4
        %v419 = vadd.f32 %v356, %v418
        %v420 = vrot.slane %v419, 2
        %v421 = vadd.f32 %v419, %v420
        %v422 = vrot.slane %v421, 1
        %v423 = vadd.f32 %v421, %v422
        %v424 = vrot.slane %v357, 4
        %v425 = vadd.f32 %v357, %v424
        %v426 = vrot.slane %v425, 2
        %v427 = vadd.f32 %v425, %v426
        %v428 = vrot.slane %v427, 1
        %v429 = vadd.f32 %v427, %v428
        %v430 = vrot.slane %v358, 4
        %v431 = vadd.f32 %v358, %v430
        %v432 = vrot.slane %v431, 2
        %v433 = vadd.f32 %v431, %v432
        %v434 = vrot.slane %v433, 1
        %v435 = vadd.f32 %v433, %v434
        %v436 = vrot.slane %v359, 4
        %v437 = vadd.f32 %v359, %v436
        %v438 = vrot.slane %v437, 2
        %v439 = vadd.f32 %v437, %v438
        %v440 = vrot.slane %v439, 1
        %v441 = vadd.f32 %v439, %v440
        %v442 = vrot.slane %v360, 4
        %v443 = vadd.f32 %v360, %v442
        %v444 = vrot.slane %v443, 2
        %v445 = vadd.f32 %v443, %v444
        %v446 = vrot.slane %v445, 1
        %v447 = vadd.f32 %v445, %v446
        %v448 = vrot.slane %v361, 4
        %v449 = vadd.f32 %v361, %v448
        %v450 = vrot.slane %v449, 2
        %v451 = vadd.f32 %v449, %v450
        %v452 = vrot.slane %v451, 1
        %v453 = vadd.f32 %v451, %v452
        %v454 = vrot.slane %v362, 4
        %v455 = vadd.f32 %v362, %v454
        %v456 = vrot.slane %v455, 2
        %v457 = vadd.f32 %v455, %v456
        %v458 = vrot.slane %v457, 1
        %v459 = vadd.f32 %v457, %v458
        %v460 = vrot.slane %v363, 4
        %v461 = vadd.f32 %v363, %v460
        %v462 = vrot.slane %v461, 2
        %v463 = vadd.f32 %v461, %v462
        %v464 = vrot.slane %v463, 1
        %v465 = vadd.f32 %v463, %v464
        %v466 = vrot.slane %v364, 4
        %v467 = vadd.f32 %v364, %v466
        %v468 = vrot.slane %v467, 2
        %v469 = vadd.f32 %v467, %v468
        %v470 = vrot.slane %v469, 1
        %v471 = vadd.f32 %v469, %v470
        %v472 = vrot.slane %v365, 4
        %v473 = vadd.f32 %v365, %v472
        %v474 = vrot.slane %v473, 2
        %v475 = vadd.f32 %v473, %v474
        %v476 = vrot.slane %v475, 1
        %v477 = vadd.f32 %v475, %v476
        %v478 = vrot.slane %v366, 4
        %v479 = vadd.f32 %v366, %v478
        %v480 = vrot.slane %v479, 2
        %v481 = vadd.f32 %v479, %v480
        %v482 = vrot.slane %v481, 1
        %v483 = vadd.f32 %v481, %v482
        %v484 = vrot.slane %v367, 4
        %v485 = vadd.f32 %v367, %v484
        %v486 = vrot.slane %v485, 2
        %v487 = vadd.f32 %v485, %v486
        %v488 = vrot.slane %v487, 1
        %v489 = vadd.f32 %v487, %v488
        %v490 = vrot.slane %v368, 4
        %v491 = vadd.f32 %v368, %v490
        %v492 = vrot.slane %v491, 2
        %v493 = vadd.f32 %v491, %v492
        %v494 = vrot.slane %v493, 1
        %v495 = vadd.f32 %v493, %v494
        %v496 = vrot.slane %v369, 4
        %v497 = vadd.f32 %v369, %v496
        %v498 = vrot.slane %v497, 2
        %v499 = vadd.f32 %v497, %v498
        %v500 = vrot.slane %v499, 1
        %v501 = vadd.f32 %v499, %v500
        %v502 = vrot.slane %v370, 4
        %v503 = vadd.f32 %v370, %v502
        %v504 = vrot.slane %v503, 2
        %v505 = vadd.f32 %v503, %v504
        %v506 = vrot.slane %v505, 1
        %v507 = vadd.f32 %v505, %v506
        %v508 = vrot.slane %v371, 4
        %v509 = vadd.f32 %v371, %v508
        %v510 = vrot.slane %v509, 2
        %v511 = vadd.f32 %v509, %v510
        %v512 = vrot.slane %v511, 1
        %v513 = vadd.f32 %v511, %v512
        %v514 = vrot.slane %v372, 4
        %v515 = vadd.f32 %v372, %v514
        %v516 = vrot.slane %v515, 2
        %v517 = vadd.f32 %v515, %v516
        %v518 = vrot.slane %v517, 1
        %v519 = vadd.f32 %v517, %v518
        %v520 = vrot.slane %v373, 4
        %v521 = vadd.f32 %v373, %v520
        %v522 = vrot.slane %v521, 2
        %v523 = vadd.f32 %v521, %v522
        %v524 = vrot.slane %v523, 1
        %v525 = vadd.f32 %v523, %v524
        %v526 = vrot.slane %v374, 4
        %v527 = vadd.f32 %v374, %v526
        %v528 = vrot.slane %v527, 2
        %v529 = vadd.f32 %v527, %v528
        %v530 = vrot.slane %v529, 1
        %v531 = vadd.f32 %v529, %v530
        %v532 = vrot.slane %v375, 4
        %v533 = vadd.f32 %v375, %v532
        %v534 = vrot.slane %v533, 2
        %v535 = vadd.f32 %v533, %v534
        %v536 = vrot.slane %v535, 1
        %v537 = vadd.f32 %v535, %v536
        %v538 = vrot.slane %v376, 4
        %v539 = vadd.f32 %v376, %v538
        %v540 = vrot.slane %v539, 2
        %v541 = vadd.f32 %v539, %v540
        %v542 = vrot.slane %v541, 1
        %v543 = vadd.f32 %v541, %v542
        %v544 = vrot.slane %v377, 4
        %v545 = vadd.f32 %v377, %v544
        %v546 = vrot.slane %v545, 2
        %v547 = vadd.f32 %v545, %v546
        %v548 = vrot.slane %v547, 1
        %v549 = vadd.f32 %v547, %v548
        %v550 = vrot.slane %v378, 4
        %v551 = vadd.f32 %v378, %v550
        %v552 = vrot.slane %v551, 2
        %v553 = vadd.f32 %v551, %v552
        %v554 = vrot.slane %v553, 1
        %v555 = vadd.f32 %v553, %v554
        %v556 = vrot.slane %v379, 4
        %v557 = vadd.f32 %v379, %v556
        %v558 = vrot.slane %v557, 2
        %v559 = vadd.f32 %v557, %v558
        %v560 = vrot.slane %v559, 1
        %v561 = vadd.f32 %v559, %v560
        %v562 = vrot.slane %v380, 4
        %v563 = vadd.f32 %v380, %v562
        %v564 = vrot.slane %v563, 2
        %v565 = vadd.f32 %v563, %v564
        %v566 = vrot.slane %v565, 1
        %v567 = vadd.f32 %v565, %v566
        %v568 = vrot.slane %v381, 4
        %v569 = vadd.f32 %v381, %v568
        %v570 = vrot.slane %v569, 2
        %v571 = vadd.f32 %v569, %v570
        %v572 = vrot.slane %v571, 1
        %v573 = vadd.f32 %v571, %v572
        %v606 = vrot.slane %v393, 4
        %v607 = vrot.slane %v405, 4
        %v608 = vrot.slane %v417, 4
        %v609 = vrot.slane %v429, 4
        %v610 = vrot.slane %v441, 4
        %v611 = vrot.slane %v453, 4
        %v612 = vrot.slane %v465, 4
        %v613 = vrot.slane %v477, 4
        %v614 = vrot.slane %v489, 4
        %v615 = vrot.slane %v501, 4
        %v616 = vrot.slane %v513, 4
        %v617 = vrot.slane %v525, 4
        %v618 = vrot.slane %v537, 4
        %v619 = vrot.slane %v549, 4
        %v620 = vrot.slane %v561, 4
        %v621 = vrot.slane %v573, 4
        %vm622 = vcmask 1043456
        %v623 = vsel %vm622, %v387, %v606
        %v624 = vsel %vm622, %v399, %v607
        %v625 = vsel %vm622, %v411, %v608
        %v626 = vsel %vm622, %v423, %v609
        %v627 = vsel %vm622, %v435, %v610
        %v628 = vsel %vm622, %v447, %v611
        %v629 = vsel %vm622, %v459, %v612
        %v630 = vsel %vm622, %v471, %v613
        %v631 = vsel %vm622, %v483, %v614
        %v632 = vsel %vm622, %v495, %v615
        %v633 = vsel %vm622, %v507, %v616
        %v634 = vsel %vm622, %v519, %v617
        %v635 = vsel %vm622, %v531, %v618
        %v636 = vsel %vm622, %v543, %v619
        %v637 = vsel %vm622, %v555, %v620
        %v638 = vsel %vm622, %v567, %v621
        %v639 = vrot.slane %v627, 7
        %vm640 = vcmask 1041409
        %v641 = vsel %vm640, %v639, %v623
        %vm642 = vcmask 1045509
        %v643 = vsel %vm642, %v639, %v641
        %v644 = vrot.slane %v631, 6
        %vm645 = vcmask 1042434
        %v646 = vsel %vm645, %v644, %v643
        %vm647 = vcmask 1046534
        %v648 = vsel %vm647, %v644, %v646
        %v649 = vrot.slane %v635, 5
        %vm650 = vcmask 1043459
        %v651 = vsel %vm650, %v649, %v648
        %vm652 = vcmask 1047559
        %v653 = vsel %vm652, %v649, %v651
        %v654 = vrot.slane %v628, 7
        %v655 = vsel %vm640, %v654, %v624
        %v656 = vsel %vm642, %v654, %v655
        %v657 = vrot.slane %v632, 6
        %v658 = vsel %vm645, %v657, %v656
        %v659 = vsel %vm647, %v657, %v658
        %v660 = vrot.slane %v636, 5
        %v661 = vsel %vm650, %v660, %v659
        %v662 = vsel %vm652, %v660, %v661
        %v663 = vrot.slane %v629, 7
        %v664 = vsel %vm640, %v663, %v625
        %v665 = vsel %vm642, %v663, %v664
        %v666 = vrot.slane %v633, 6
        %v667 = vsel %vm645, %v666, %v665
        %v668 = vsel %vm647, %v666, %v667
        %v669 = vrot.slane %v637, 5
        %v670 = vsel %vm650, %v669, %v668
        %v671 = vsel %vm652, %v669, %v670
        %v672 = vrot.slane %v630, 7
        %v673 = vsel %vm640, %v672, %v626
        %v674 = vsel %vm642, %v672, %v673
        %v675 = vrot.slane %v634, 6
        %v676 = vsel %vm645, %v675, %v674
        %v677 = vsel %vm647, %v675, %v676
        %v678 = vrot.slane %v638, 5
        %v679 = vsel %vm650, %v678, %v677
        %v680 = vsel %vm652, %v678, %v679
        %v685 = vadd.f32 %v330, %v653
        %v686 = vadd.f32 %v331, %v662
        %v687 = vadd.f32 %v332, %v671
        %v688 = vadd.f32 %v333, %v680
        %689 = vst [vmem:[#allocation2] sm:$0xff] %v685
        %690 = vst [vmem:[#allocation2 + $0x8] sm:$0xff] %v686
        %691 = vst [vmem:[#allocation2 + $0x10] sm:$0xff] %v687
        %692 = vst [vmem:[#allocation2 + $0x18] sm:$0xff] %v688
        %p693 = scmp.eq.s32.totalorder %s23, 1
        // Predicated region
        $region69: #{tpu_custom_call.1} parent=43 // pred_check
          %p694 = pneg %p693
        $region70: #{tpu_custom_call.1} parent=43 // pred_check_branch
          %696 = sbr.rel (%p694) target = $region72
        $region71: #{tpu_custom_call.1} parent=43 // pred_region
          %v697 = vld [vmem:[#allocation2] sm:$0xff]
          %v698 = vld [vmem:[#allocation2 + $0x8] sm:$0xff]
          %v699 = vld [vmem:[#allocation2 + $0x10] sm:$0xff]
          %v700 = vld [vmem:[#allocation2 + $0x18] sm:$0xff]
          %v701 = vmul.f32 %v697, 0.0625
          %v702 = vmul.f32 %v698, 0.0625
          %v703 = vmul.f32 %v699, 0.0625
          %v704 = vmul.f32 %v700, 0.0625
          %709 = vst [vmem:[#allocation1] ss:$2 sm:$0xff] %v701
          %s710 = scalar_lea.vmem [#allocation1], 16
          %711 = vst [vmem:[%s710] ss:$2 sm:$0xff] %v702
          %s712 = scalar_lea.vmem [#allocation1], 32
          %713 = vst [vmem:[%s712] ss:$2 sm:$0xff] %v703
          %s714 = scalar_lea.vmem [#allocation1], 48
          %715 = vst [vmem:[%s714] ss:$2 sm:$0xff] %v704
          %v716 = vld.sshfl [vmem:[#allocation1] sm:$0xff pattern:$0x75316420]
          %v717 = vld.sshfl [vmem:[#allocation1 + $0x8] sm:$0xff pattern:$0x75316420]
          %v718 = vld.sshfl [vmem:[#allocation1 + $0x10] sm:$0xff pattern:$0x75316420]
          %v719 = vld.sshfl [vmem:[#allocation1 + $0x18] sm:$0xff pattern:$0x75316420]
          %v720 = vld.sshfl [vmem:[#allocation1 + $0x20] sm:$0xff pattern:$0x75316420]
          %v721 = vld.sshfl [vmem:[#allocation1 + $0x28] sm:$0xff pattern:$0x75316420]
          %v722 = vld.sshfl [vmem:[#allocation1 + $0x30] sm:$0xff pattern:$0x75316420]
          %v723 = vld.sshfl [vmem:[#allocation1 + $0x38] sm:$0xff pattern:$0x75316420]
          %v732 = vpack.c.bf16 %v716, %v716
          %v733 = vpack.c.bf16 %v717, %v717
          %v734 = vpack.c.bf16 %v718, %v718
          %v735 = vpack.c.bf16 %v719, %v719
          %v736 = vpack.c.bf16 %v720, %v720
          %v737 = vpack.c.bf16 %v721, %v721
          %v738 = vpack.c.bf16 %v722, %v722
          %v739 = vpack.c.bf16 %v723, %v723
          %v740 = vld [vmem:[#allocation6] sm:$0xff]
          %v741 = vld [vmem:[#allocation6 + $0x8] sm:$0xff]
          %v742 = vld [vmem:[#allocation6 + $0x10] sm:$0xff]
          %v743 = vld [vmem:[#allocation6 + $0x18] sm:$0xff]
          %v744 = vld [vmem:[#allocation6 + $0x20] sm:$0xff]
          %v745 = vld [vmem:[#allocation6 + $0x28] sm:$0xff]
          %v746 = vld [vmem:[#allocation6 + $0x30] sm:$0xff]
          %v747 = vld [vmem:[#allocation6 + $0x38] sm:$0xff]
          %v748 = vld [vmem:[#allocation6 + $0x40] sm:$0xff]
          %v749 = vld [vmem:[#allocation6 + $0x48] sm:$0xff]
          %v750 = vld [vmem:[#allocation6 + $0x50] sm:$0xff]
          %v751 = vld [vmem:[#allocation6 + $0x58] sm:$0xff]
          %v752 = vld [vmem:[#allocation6 + $0x60] sm:$0xff]
          %v753 = vld [vmem:[#allocation6 + $0x68] sm:$0xff]
          %v754 = vld [vmem:[#allocation6 + $0x70] sm:$0xff]
          %v755 = vld [vmem:[#allocation6 + $0x78] sm:$0xff]
          %v756 = vld [vmem:[#allocation6 + $0x80] sm:$0xff]
          %v757 = vld [vmem:[#allocation6 + $0x88] sm:$0xff]
          %v758 = vld [vmem:[#allocation6 + $0x90] sm:$0xff]
          %v759 = vld [vmem:[#allocation6 + $0x98] sm:$0xff]
          %v760 = vld [vmem:[#allocation6 + $0xa0] sm:$0xff]
          %v761 = vld [vmem:[#allocation6 + $0xa8] sm:$0xff]
          %v762 = vld [vmem:[#allocation6 + $0xb0] sm:$0xff]
          %v763 = vld [vmem:[#allocation6 + $0xb8] sm:$0xff]
          %v764 = vld [vmem:[#allocation6 + $0xc0] sm:$0xff]
          %v765 = vld [vmem:[#allocation6 + $0xc8] sm:$0xff]
          %v766 = vld [vmem:[#allocation6 + $0xd0] sm:$0xff]
          %v767 = vld [vmem:[#allocation6 + $0xd8] sm:$0xff]
          %v768 = vld [vmem:[#allocation6 + $0xe0] sm:$0xff]
          %v769 = vld [vmem:[#allocation6 + $0xe8] sm:$0xff]
          %v770 = vld [vmem:[#allocation6 + $0xf0] sm:$0xff]
          %v771 = vld [vmem:[#allocation6 + $0xf8] sm:$0xff]
          %v772 = vld [vmem:[#allocation6 + $0x100] sm:$0xff]
          %v773 = vld [vmem:[#allocation6 + $0x108] sm:$0xff]
          %v774 = vld [vmem:[#allocation6 + $0x110] sm:$0xff]
          %v775 = vld [vmem:[#allocation6 + $0x118] sm:$0xff]
          %v776 = vld [vmem:[#allocation6 + $0x120] sm:$0xff]
          %v777 = vld [vmem:[#allocation6 + $0x128] sm:$0xff]
          %v778 = vld [vmem:[#allocation6 + $0x130] sm:$0xff]
          %v779 = vld [vmem:[#allocation6 + $0x138] sm:$0xff]
          %v780 = vld [vmem:[#allocation6 + $0x140] sm:$0xff]
          %v781 = vld [vmem:[#allocation6 + $0x148] sm:$0xff]
          %v782 = vld [vmem:[#allocation6 + $0x150] sm:$0xff]
          %v783 = vld [vmem:[#allocation6 + $0x158] sm:$0xff]
          %v784 = vld [vmem:[#allocation6 + $0x160] sm:$0xff]
          %v785 = vld [vmem:[#allocation6 + $0x168] sm:$0xff]
          %v786 = vld [vmem:[#allocation6 + $0x170] sm:$0xff]
          %v787 = vld [vmem:[#allocation6 + $0x178] sm:$0xff]
          %v788 = vld [vmem:[#allocation6 + $0x180] sm:$0xff]
          %v789 = vld [vmem:[#allocation6 + $0x188] sm:$0xff]
          %v790 = vld [vmem:[#allocation6 + $0x190] sm:$0xff]
          %v791 = vld [vmem:[#allocation6 + $0x198] sm:$0xff]
          %v792 = vld [vmem:[#allocation6 + $0x1a0] sm:$0xff]
          %v793 = vld [vmem:[#allocation6 + $0x1a8] sm:$0xff]
          %v794 = vld [vmem:[#allocation6 + $0x1b0] sm:$0xff]
          %v795 = vld [vmem:[#allocation6 + $0x1b8] sm:$0xff]
          %v796 = vld [vmem:[#allocation6 + $0x1c0] sm:$0xff]
          %v797 = vld [vmem:[#allocation6 + $0x1c8] sm:$0xff]
          %v798 = vld [vmem:[#allocation6 + $0x1d0] sm:$0xff]
          %v799 = vld [vmem:[#allocation6 + $0x1d8] sm:$0xff]
          %v800 = vld [vmem:[#allocation6 + $0x1e0] sm:$0xff]
          %v801 = vld [vmem:[#allocation6 + $0x1e8] sm:$0xff]
          %v802 = vld [vmem:[#allocation6 + $0x1f0] sm:$0xff]
          %v803 = vld [vmem:[#allocation6 + $0x1f8] sm:$0xff]
          %v804 = vld [vmem:[#allocation6 + $0x200] sm:$0xff]
          %v805 = vld [vmem:[#allocation6 + $0x208] sm:$0xff]
          %v806 = vld [vmem:[#allocation6 + $0x210] sm:$0xff]
          %v807 = vld [vmem:[#allocation6 + $0x218] sm:$0xff]
          %v808 = vld [vmem:[#allocation6 + $0x220] sm:$0xff]
          %v809 = vld [vmem:[#allocation6 + $0x228] sm:$0xff]
          %v810 = vld [vmem:[#allocation6 + $0x230] sm:$0xff]
          %v811 = vld [vmem:[#allocation6 + $0x238] sm:$0xff]
          %v812 = vld [vmem:[#allocation6 + $0x240] sm:$0xff]
          %v813 = vld [vmem:[#allocation6 + $0x248] sm:$0xff]
          %v814 = vld [vmem:[#allocation6 + $0x250] sm:$0xff]
          %v815 = vld [vmem:[#allocation6 + $0x258] sm:$0xff]
          %v816 = vld [vmem:[#allocation6 + $0x260] sm:$0xff]
          %v817 = vld [vmem:[#allocation6 + $0x268] sm:$0xff]
          %v818 = vld [vmem:[#allocation6 + $0x270] sm:$0xff]
          %v819 = vld [vmem:[#allocation6 + $0x278] sm:$0xff]
          %v820 = vld [vmem:[#allocation6 + $0x280] sm:$0xff]
          %v821 = vld [vmem:[#allocation6 + $0x288] sm:$0xff]
          %v822 = vld [vmem:[#allocation6 + $0x290] sm:$0xff]
          %v823 = vld [vmem:[#allocation6 + $0x298] sm:$0xff]
          %v824 = vld [vmem:[#allocation6 + $0x2a0] sm:$0xff]
          %v825 = vld [vmem:[#allocation6 + $0x2a8] sm:$0xff]
          %v826 = vld [vmem:[#allocation6 + $0x2b0] sm:$0xff]
          %v827 = vld [vmem:[#allocation6 + $0x2b8] sm:$0xff]
          %v828 = vld [vmem:[#allocation6 + $0x2c0] sm:$0xff]
          %v829 = vld [vmem:[#allocation6 + $0x2c8] sm:$0xff]
          %v830 = vld [vmem:[#allocation6 + $0x2d0] sm:$0xff]
          %v831 = vld [vmem:[#allocation6 + $0x2d8] sm:$0xff]
          %v832 = vld [vmem:[#allocation6 + $0x2e0] sm:$0xff]
          %v833 = vld [vmem:[#allocation6 + $0x2e8] sm:$0xff]
          %v834 = vld [vmem:[#allocation6 + $0x2f0] sm:$0xff]
          %v835 = vld [vmem:[#allocation6 + $0x2f8] sm:$0xff]
          %v836 = vld [vmem:[#allocation6 + $0x300] sm:$0xff]
          %v837 = vld [vmem:[#allocation6 + $0x308] sm:$0xff]
          %v838 = vld [vmem:[#allocation6 + $0x310] sm:$0xff]
          %v839 = vld [vmem:[#allocation6 + $0x318] sm:$0xff]
          %v840 = vld [vmem:[#allocation6 + $0x320] sm:$0xff]
          %v841 = vld [vmem:[#allocation6 + $0x328] sm:$0xff]
          %v842 = vld [vmem:[#allocation6 + $0x330] sm:$0xff]
          %v843 = vld [vmem:[#allocation6 + $0x338] sm:$0xff]
          %v844 = vld [vmem:[#allocation6 + $0x340] sm:$0xff]
          %v845 = vld [vmem:[#allocation6 + $0x348] sm:$0xff]
          %v846 = vld [vmem:[#allocation6 + $0x350] sm:$0xff]
          %v847 = vld [vmem:[#allocation6 + $0x358] sm:$0xff]
          %v848 = vld [vmem:[#allocation6 + $0x360] sm:$0xff]
          %v849 = vld [vmem:[#allocation6 + $0x368] sm:$0xff]
          %v850 = vld [vmem:[#allocation6 + $0x370] sm:$0xff]
          %v851 = vld [vmem:[#allocation6 + $0x378] sm:$0xff]
          %v852 = vld [vmem:[#allocation6 + $0x380] sm:$0xff]
          %v853 = vld [vmem:[#allocation6 + $0x388] sm:$0xff]
          %v854 = vld [vmem:[#allocation6 + $0x390] sm:$0xff]
          %v855 = vld [vmem:[#allocation6 + $0x398] sm:$0xff]
          %v856 = vld [vmem:[#allocation6 + $0x3a0] sm:$0xff]
          %v857 = vld [vmem:[#allocation6 + $0x3a8] sm:$0xff]
          %v858 = vld [vmem:[#allocation6 + $0x3b0] sm:$0xff]
          %v859 = vld [vmem:[#allocation6 + $0x3b8] sm:$0xff]
          %v860 = vld [vmem:[#allocation6 + $0x3c0] sm:$0xff]
          %v861 = vld [vmem:[#allocation6 + $0x3c8] sm:$0xff]
          %v862 = vld [vmem:[#allocation6 + $0x3d0] sm:$0xff]
          %v863 = vld [vmem:[#allocation6 + $0x3d8] sm:$0xff]
          %v864 = vld [vmem:[#allocation6 + $0x3e0] sm:$0xff]
          %v865 = vld [vmem:[#allocation6 + $0x3e8] sm:$0xff]
          %v866 = vld [vmem:[#allocation6 + $0x3f0] sm:$0xff]
          %v867 = vld [vmem:[#allocation6 + $0x3f8] sm:$0xff]
          %v868 = vld [vmem:[#allocation6 + $0x400] sm:$0xff]
          %v869 = vld [vmem:[#allocation6 + $0x408] sm:$0xff]
          %v870 = vld [vmem:[#allocation6 + $0x410] sm:$0xff]
          %v871 = vld [vmem:[#allocation6 + $0x418] sm:$0xff]
          %v872 = vld [vmem:[#allocation6 + $0x420] sm:$0xff]
          %v873 = vld [vmem:[#allocation6 + $0x428] sm:$0xff]
          %v874 = vld [vmem:[#allocation6 + $0x430] sm:$0xff]
          %v875 = vld [vmem:[#allocation6 + $0x438] sm:$0xff]
          %v876 = vld [vmem:[#allocation6 + $0x440] sm:$0xff]
          %v877 = vld [vmem:[#allocation6 + $0x448] sm:$0xff]
          %v878 = vld [vmem:[#allocation6 + $0x450] sm:$0xff]
          %v879 = vld [vmem:[#allocation6 + $0x458] sm:$0xff]
          %v880 = vld [vmem:[#allocation6 + $0x460] sm:$0xff]
          %v881 = vld [vmem:[#allocation6 + $0x468] sm:$0xff]
          %v882 = vld [vmem:[#allocation6 + $0x470] sm:$0xff]
          %v883 = vld [vmem:[#allocation6 + $0x478] sm:$0xff]
          %v884 = vld [vmem:[#allocation6 + $0x480] sm:$0xff]
          %v885 = vld [vmem:[#allocation6 + $0x488] sm:$0xff]
          %v886 = vld [vmem:[#allocation6 + $0x490] sm:$0xff]
          %v887 = vld [vmem:[#allocation6 + $0x498] sm:$0xff]
          %v888 = vld [vmem:[#allocation6 + $0x4a0] sm:$0xff]
          %v889 = vld [vmem:[#allocation6 + $0x4a8] sm:$0xff]
          %v890 = vld [vmem:[#allocation6 + $0x4b0] sm:$0xff]
          %v891 = vld [vmem:[#allocation6 + $0x4b8] sm:$0xff]
          %v892 = vld [vmem:[#allocation6 + $0x4c0] sm:$0xff]
          %v893 = vld [vmem:[#allocation6 + $0x4c8] sm:$0xff]
          %v894 = vld [vmem:[#allocation6 + $0x4d0] sm:$0xff]
          %v895 = vld [vmem:[#allocation6 + $0x4d8] sm:$0xff]
          %v896 = vld [vmem:[#allocation6 + $0x4e0] sm:$0xff]
          %v897 = vld [vmem:[#allocation6 + $0x4e8] sm:$0xff]
          %v898 = vld [vmem:[#allocation6 + $0x4f0] sm:$0xff]
          %v899 = vld [vmem:[#allocation6 + $0x4f8] sm:$0xff]
          %v900 = vld [vmem:[#allocation6 + $0x500] sm:$0xff]
          %v901 = vld [vmem:[#allocation6 + $0x508] sm:$0xff]
          %v902 = vld [vmem:[#allocation6 + $0x510] sm:$0xff]
          %v903 = vld [vmem:[#allocation6 + $0x518] sm:$0xff]
          %v904 = vld [vmem:[#allocation6 + $0x520] sm:$0xff]
          %v905 = vld [vmem:[#allocation6 + $0x528] sm:$0xff]
          %v906 = vld [vmem:[#allocation6 + $0x530] sm:$0xff]
          %v907 = vld [vmem:[#allocation6 + $0x538] sm:$0xff]
          %v908 = vld [vmem:[#allocation6 + $0x540] sm:$0xff]
          %v909 = vld [vmem:[#allocation6 + $0x548] sm:$0xff]
          %v910 = vld [vmem:[#allocation6 + $0x550] sm:$0xff]
          %v911 = vld [vmem:[#allocation6 + $0x558] sm:$0xff]
          %v912 = vld [vmem:[#allocation6 + $0x560] sm:$0xff]
          %v913 = vld [vmem:[#allocation6 + $0x568] sm:$0xff]
          %v914 = vld [vmem:[#allocation6 + $0x570] sm:$0xff]
          %v915 = vld [vmem:[#allocation6 + $0x578] sm:$0xff]
          %v916 = vld [vmem:[#allocation6 + $0x580] sm:$0xff]
          %v917 = vld [vmem:[#allocation6 + $0x588] sm:$0xff]
          %v918 = vld [vmem:[#allocation6 + $0x590] sm:$0xff]
          %v919 = vld [vmem:[#allocation6 + $0x598] sm:$0xff]
          %v920 = vld [vmem:[#allocation6 + $0x5a0] sm:$0xff]
          %v921 = vld [vmem:[#allocation6 + $0x5a8] sm:$0xff]
          %v922 = vld [vmem:[#allocation6 + $0x5b0] sm:$0xff]
          %v923 = vld [vmem:[#allocation6 + $0x5b8] sm:$0xff]
          %v924 = vld [vmem:[#allocation6 + $0x5c0] sm:$0xff]
          %v925 = vld [vmem:[#allocation6 + $0x5c8] sm:$0xff]
          %v926 = vld [vmem:[#allocation6 + $0x5d0] sm:$0xff]
          %v927 = vld [vmem:[#allocation6 + $0x5d8] sm:$0xff]
          %v928 = vld [vmem:[#allocation6 + $0x5e0] sm:$0xff]
          %v929 = vld [vmem:[#allocation6 + $0x5e8] sm:$0xff]
          %v930 = vld [vmem:[#allocation6 + $0x5f0] sm:$0xff]
          %v931 = vld [vmem:[#allocation6 + $0x5f8] sm:$0xff]
          %v932 = vld [vmem:[#allocation6 + $0x600] sm:$0xff]
          %v933 = vld [vmem:[#allocation6 + $0x608] sm:$0xff]
          %v934 = vld [vmem:[#allocation6 + $0x610] sm:$0xff]
          %v935 = vld [vmem:[#allocation6 + $0x618] sm:$0xff]
          %v936 = vld [vmem:[#allocation6 + $0x620] sm:$0xff]
          %v937 = vld [vmem:[#allocation6 + $0x628] sm:$0xff]
          %v938 = vld [vmem:[#allocation6 + $0x630] sm:$0xff]
          %v939 = vld [vmem:[#allocation6 + $0x638] sm:$0xff]
          %v940 = vld [vmem:[#allocation6 + $0x640] sm:$0xff]
          %v941 = vld [vmem:[#allocation6 + $0x648] sm:$0xff]
          %v942 = vld [vmem:[#allocation6 + $0x650] sm:$0xff]
          %v943 = vld [vmem:[#allocation6 + $0x658] sm:$0xff]
          %v944 = vld [vmem:[#allocation6 + $0x660] sm:$0xff]
          %v945 = vld [vmem:[#allocation6 + $0x668] sm:$0xff]
          %v946 = vld [vmem:[#allocation6 + $0x670] sm:$0xff]
          %v947 = vld [vmem:[#allocation6 + $0x678] sm:$0xff]
          %v948 = vld [vmem:[#allocation6 + $0x680] sm:$0xff]
          %v949 = vld [vmem:[#allocation6 + $0x688] sm:$0xff]
          %v950 = vld [vmem:[#allocation6 + $0x690] sm:$0xff]
          %v951 = vld [vmem:[#allocation6 + $0x698] sm:$0xff]
          %v952 = vld [vmem:[#allocation6 + $0x6a0] sm:$0xff]
          %v953 = vld [vmem:[#allocation6 + $0x6a8] sm:$0xff]
          %v954 = vld [vmem:[#allocation6 + $0x6b0] sm:$0xff]
          %v955 = vld [vmem:[#allocation6 + $0x6b8] sm:$0xff]
          %v956 = vld [vmem:[#allocation6 + $0x6c0] sm:$0xff]
          %v957 = vld [vmem:[#allocation6 + $0x6c8] sm:$0xff]
          %v958 = vld [vmem:[#allocation6 + $0x6d0] sm:$0xff]
          %v959 = vld [vmem:[#allocation6 + $0x6d8] sm:$0xff]
          %v960 = vld [vmem:[#allocation6 + $0x6e0] sm:$0xff]
          %v961 = vld [vmem:[#allocation6 + $0x6e8] sm:$0xff]
          %v962 = vld [vmem:[#allocation6 + $0x6f0] sm:$0xff]
          %v963 = vld [vmem:[#allocation6 + $0x6f8] sm:$0xff]
          %v964 = vld [vmem:[#allocation6 + $0x700] sm:$0xff]
          %v965 = vld [vmem:[#allocation6 + $0x708] sm:$0xff]
          %v966 = vld [vmem:[#allocation6 + $0x710] sm:$0xff]
          %v967 = vld [vmem:[#allocation6 + $0x718] sm:$0xff]
          %v968 = vld [vmem:[#allocation6 + $0x720] sm:$0xff]
          %v969 = vld [vmem:[#allocation6 + $0x728] sm:$0xff]
          %v970 = vld [vmem:[#allocation6 + $0x730] sm:$0xff]
          %v971 = vld [vmem:[#allocation6 + $0x738] sm:$0xff]
          %v972 = vld [vmem:[#allocation6 + $0x740] sm:$0xff]
          %v973 = vld [vmem:[#allocation6 + $0x748] sm:$0xff]
          %v974 = vld [vmem:[#allocation6 + $0x750] sm:$0xff]
          %v975 = vld [vmem:[#allocation6 + $0x758] sm:$0xff]
          %v976 = vld [vmem:[#allocation6 + $0x760] sm:$0xff]
          %v977 = vld [vmem:[#allocation6 + $0x768] sm:$0xff]
          %v978 = vld [vmem:[#allocation6 + $0x770] sm:$0xff]
          %v979 = vld [vmem:[#allocation6 + $0x778] sm:$0xff]
          %v980 = vld [vmem:[#allocation6 + $0x780] sm:$0xff]
          %v981 = vld [vmem:[#allocation6 + $0x788] sm:$0xff]
          %v982 = vld [vmem:[#allocation6 + $0x790] sm:$0xff]
          %v983 = vld [vmem:[#allocation6 + $0x798] sm:$0xff]
          %v984 = vld [vmem:[#allocation6 + $0x7a0] sm:$0xff]
          %v985 = vld [vmem:[#allocation6 + $0x7a8] sm:$0xff]
          %v986 = vld [vmem:[#allocation6 + $0x7b0] sm:$0xff]
          %v987 = vld [vmem:[#allocation6 + $0x7b8] sm:$0xff]
          %v988 = vld [vmem:[#allocation6 + $0x7c0] sm:$0xff]
          %v989 = vld [vmem:[#allocation6 + $0x7c8] sm:$0xff]
          %v990 = vld [vmem:[#allocation6 + $0x7d0] sm:$0xff]
          %v991 = vld [vmem:[#allocation6 + $0x7d8] sm:$0xff]
          %v992 = vld [vmem:[#allocation6 + $0x7e0] sm:$0xff]
          %v993 = vld [vmem:[#allocation6 + $0x7e8] sm:$0xff]
          %v994 = vld [vmem:[#allocation6 + $0x7f0] sm:$0xff]
          %v995 = vld [vmem:[#allocation6 + $0x7f8] sm:$0xff]
          %v1252 = vunpack.c.l.b16 %v740
          %v1253 = vunpack.c.h.b16 %v740
          %v1254 = vunpack.c.l.b16 %v741
          %v1255 = vunpack.c.h.b16 %v741
          %v1256 = vunpack.c.l.b16 %v742
          %v1257 = vunpack.c.h.b16 %v742
          %v1258 = vunpack.c.l.b16 %v743
          %v1259 = vunpack.c.h.b16 %v743
          %v1260 = vunpack.c.l.b16 %v744
          %v1261 = vunpack.c.h.b16 %v744
          %v1262 = vunpack.c.l.b16 %v745
          %v1263 = vunpack.c.h.b16 %v745
          %v1264 = vunpack.c.l.b16 %v746
          %v1265 = vunpack.c.h.b16 %v746
          %v1266 = vunpack.c.l.b16 %v747
          %v1267 = vunpack.c.h.b16 %v747
          %v1268 = vunpack.c.l.b16 %v748
          %v1269 = vunpack.c.h.b16 %v748
          %v1270 = vunpack.c.l.b16 %v749
          %v1271 = vunpack.c.h.b16 %v749
          %v1272 = vunpack.c.l.b16 %v750
          %v1273 = vunpack.c.h.b16 %v750
          %v1274 = vunpack.c.l.b16 %v751
          %v1275 = vunpack.c.h.b16 %v751
          %v1276 = vunpack.c.l.b16 %v752
          %v1277 = vunpack.c.h.b16 %v752
          %v1278 = vunpack.c.l.b16 %v753
          %v1279 = vunpack.c.h.b16 %v753
          %v1280 = vunpack.c.l.b16 %v754
          %v1281 = vunpack.c.h.b16 %v754
          %v1282 = vunpack.c.l.b16 %v755
          %v1283 = vunpack.c.h.b16 %v755
          %v1284 = vunpack.c.l.b16 %v756
          %v1285 = vunpack.c.h.b16 %v756
          %v1286 = vunpack.c.l.b16 %v757
          %v1287 = vunpack.c.h.b16 %v757
          %v1288 = vunpack.c.l.b16 %v758
          %v1289 = vunpack.c.h.b16 %v758
          %v1290 = vunpack.c.l.b16 %v759
          %v1291 = vunpack.c.h.b16 %v759
          %v1292 = vunpack.c.l.b16 %v760
          %v1293 = vunpack.c.h.b16 %v760
          %v1294 = vunpack.c.l.b16 %v761
          %v1295 = vunpack.c.h.b16 %v761
          %v1296 = vunpack.c.l.b16 %v762
          %v1297 = vunpack.c.h.b16 %v762
          %v1298 = vunpack.c.l.b16 %v763
          %v1299 = vunpack.c.h.b16 %v763
          %v1300 = vunpack.c.l.b16 %v764
          %v1301 = vunpack.c.h.b16 %v764
          %v1302 = vunpack.c.l.b16 %v765
          %v1303 = vunpack.c.h.b16 %v765
          %v1304 = vunpack.c.l.b16 %v766
          %v1305 = vunpack.c.h.b16 %v766
          %v1306 = vunpack.c.l.b16 %v767
          %v1307 = vunpack.c.h.b16 %v767
          %v1308 = vunpack.c.l.b16 %v768
          %v1309 = vunpack.c.h.b16 %v768
          %v1310 = vunpack.c.l.b16 %v769
          %v1311 = vunpack.c.h.b16 %v769
          %v1312 = vunpack.c.l.b16 %v770
          %v1313 = vunpack.c.h.b16 %v770
          %v1314 = vunpack.c.l.b16 %v771
          %v1315 = vunpack.c.h.b16 %v771
          %v1316 = vunpack.c.l.b16 %v772
          %v1317 = vunpack.c.h.b16 %v772
          %v1318 = vunpack.c.l.b16 %v773
          %v1319 = vunpack.c.h.b16 %v773
          %v1320 = vunpack.c.l.b16 %v774
          %v1321 = vunpack.c.h.b16 %v774
          %v1322 = vunpack.c.l.b16 %v775
          %v1323 = vunpack.c.h.b16 %v775
          %v1324 = vunpack.c.l.b16 %v776
          %v1325 = vunpack.c.h.b16 %v776
          %v1326 = vunpack.c.l.b16 %v777
          %v1327 = vunpack.c.h.b16 %v777
          %v1328 = vunpack.c.l.b16 %v778
          %v1329 = vunpack.c.h.b16 %v778
          %v1330 = vunpack.c.l.b16 %v779
          %v1331 = vunpack.c.h.b16 %v779
          %v1332 = vunpack.c.l.b16 %v780
          %v1333 = vunpack.c.h.b16 %v780
          %v1334 = vunpack.c.l.b16 %v781
          %v1335 = vunpack.c.h.b16 %v781
          %v1336 = vunpack.c.l.b16 %v782
          %v1337 = vunpack.c.h.b16 %v782
          %v1338 = vunpack.c.l.b16 %v783
          %v1339 = vunpack.c.h.b16 %v783
          %v1340 = vunpack.c.l.b16 %v784
          %v1341 = vunpack.c.h.b16 %v784
          %v1342 = vunpack.c.l.b16 %v785
          %v1343 = vunpack.c.h.b16 %v785
          %v1344 = vunpack.c.l.b16 %v786
          %v1345 = vunpack.c.h.b16 %v786
          %v1346 = vunpack.c.l.b16 %v787
          %v1347 = vunpack.c.h.b16 %v787
          %v1348 = vunpack.c.l.b16 %v788
          %v1349 = vunpack.c.h.b16 %v788
          %v1350 = vunpack.c.l.b16 %v789
          %v1351 = vunpack.c.h.b16 %v789
          %v1352 = vunpack.c.l.b16 %v790
          %v1353 = vunpack.c.h.b16 %v790
          %v1354 = vunpack.c.l.b16 %v791
          %v1355 = vunpack.c.h.b16 %v791
          %v1356 = vunpack.c.l.b16 %v792
          %v1357 = vunpack.c.h.b16 %v792
          %v1358 = vunpack.c.l.b16 %v793
          %v1359 = vunpack.c.h.b16 %v793
          %v1360 = vunpack.c.l.b16 %v794
          %v1361 = vunpack.c.h.b16 %v794
          %v1362 = vunpack.c.l.b16 %v795
          %v1363 = vunpack.c.h.b16 %v795
          %v1364 = vunpack.c.l.b16 %v796
          %v1365 = vunpack.c.h.b16 %v796
          %v1366 = vunpack.c.l.b16 %v797
          %v1367 = vunpack.c.h.b16 %v797
          %v1368 = vunpack.c.l.b16 %v798
          %v1369 = vunpack.c.h.b16 %v798
          %v1370 = vunpack.c.l.b16 %v799
          %v1371 = vunpack.c.h.b16 %v799
          %v1372 = vunpack.c.l.b16 %v800
          %v1373 = vunpack.c.h.b16 %v800
          %v1374 = vunpack.c.l.b16 %v801
          %v1375 = vunpack.c.h.b16 %v801
          %v1376 = vunpack.c.l.b16 %v802
          %v1377 = vunpack.c.h.b16 %v802
          %v1378 = vunpack.c.l.b16 %v803
          %v1379 = vunpack.c.h.b16 %v803
          %v1380 = vunpack.c.l.b16 %v804
          %v1381 = vunpack.c.h.b16 %v804
          %v1382 = vunpack.c.l.b16 %v805
          %v1383 = vunpack.c.h.b16 %v805
          %v1384 = vunpack.c.l.b16 %v806
          %v1385 = vunpack.c.h.b16 %v806
          %v1386 = vunpack.c.l.b16 %v807
          %v1387 = vunpack.c.h.b16 %v807
          %v1388 = vunpack.c.l.b16 %v808
          %v1389 = vunpack.c.h.b16 %v808
          %v1390 = vunpack.c.l.b16 %v809
          %v1391 = vunpack.c.h.b16 %v809
          %v1392 = vunpack.c.l.b16 %v810
          %v1393 = vunpack.c.h.b16 %v810
          %v1394 = vunpack.c.l.b16 %v811
          %v1395 = vunpack.c.h.b16 %v811
          %v1396 = vunpack.c.l.b16 %v812
          %v1397 = vunpack.c.h.b16 %v812
          %v1398 = vunpack.c.l.b16 %v813
          %v1399 = vunpack.c.h.b16 %v813
          %v1400 = vunpack.c.l.b16 %v814
          %v1401 = vunpack.c.h.b16 %v814
          %v1402 = vunpack.c.l.b16 %v815
          %v1403 = vunpack.c.h.b16 %v815
          %v1404 = vunpack.c.l.b16 %v816
          %v1405 = vunpack.c.h.b16 %v816
          %v1406 = vunpack.c.l.b16 %v817
          %v1407 = vunpack.c.h.b16 %v817
          %v1408 = vunpack.c.l.b16 %v818
          %v1409 = vunpack.c.h.b16 %v818
          %v1410 = vunpack.c.l.b16 %v819
          %v1411 = vunpack.c.h.b16 %v819
          %v1412 = vunpack.c.l.b16 %v820
          %v1413 = vunpack.c.h.b16 %v820
          %v1414 = vunpack.c.l.b16 %v821
          %v1415 = vunpack.c.h.b16 %v821
          %v1416 = vunpack.c.l.b16 %v822
          %v1417 = vunpack.c.h.b16 %v822
          %v1418 = vunpack.c.l.b16 %v823
          %v1419 = vunpack.c.h.b16 %v823
          %v1420 = vunpack.c.l.b16 %v824
          %v1421 = vunpack.c.h.b16 %v824
          %v1422 = vunpack.c.l.b16 %v825
          %v1423 = vunpack.c.h.b16 %v825
          %v1424 = vunpack.c.l.b16 %v826
          %v1425 = vunpack.c.h.b16 %v826
          %v1426 = vunpack.c.l.b16 %v827
          %v1427 = vunpack.c.h.b16 %v827
          %v1428 = vunpack.c.l.b16 %v828
          %v1429 = vunpack.c.h.b16 %v828
          %v1430 = vunpack.c.l.b16 %v829
          %v1431 = vunpack.c.h.b16 %v829
          %v1432 = vunpack.c.l.b16 %v830
          %v1433 = vunpack.c.h.b16 %v830
          %v1434 = vunpack.c.l.b16 %v831
          %v1435 = vunpack.c.h.b16 %v831
          %v1436 = vunpack.c.l.b16 %v832
          %v1437 = vunpack.c.h.b16 %v832
          %v1438 = vunpack.c.l.b16 %v833
          %v1439 = vunpack.c.h.b16 %v833
          %v1440 = vunpack.c.l.b16 %v834
          %v1441 = vunpack.c.h.b16 %v834
          %v1442 = vunpack.c.l.b16 %v835
          %v1443 = vunpack.c.h.b16 %v835
          %v1444 = vunpack.c.l.b16 %v836
          %v1445 = vunpack.c.h.b16 %v836
          %v1446 = vunpack.c.l.b16 %v837
          %v1447 = vunpack.c.h.b16 %v837
          %v1448 = vunpack.c.l.b16 %v838
          %v1449 = vunpack.c.h.b16 %v838
          %v1450 = vunpack.c.l.b16 %v839
          %v1451 = vunpack.c.h.b16 %v839
          %v1452 = vunpack.c.l.b16 %v840
          %v1453 = vunpack.c.h.b16 %v840
          %v1454 = vunpack.c.l.b16 %v841
          %v1455 = vunpack.c.h.b16 %v841
          %v1456 = vunpack.c.l.b16 %v842
          %v1457 = vunpack.c.h.b16 %v842
          %v1458 = vunpack.c.l.b16 %v843
          %v1459 = vunpack.c.h.b16 %v843
          %v1460 = vunpack.c.l.b16 %v844
          %v1461 = vunpack.c.h.b16 %v844
          %v1462 = vunpack.c.l.b16 %v845
          %v1463 = vunpack.c.h.b16 %v845
          %v1464 = vunpack.c.l.b16 %v846
          %v1465 = vunpack.c.h.b16 %v846
          %v1466 = vunpack.c.l.b16 %v847
          %v1467 = vunpack.c.h.b16 %v847
          %v1468 = vunpack.c.l.b16 %v848
          %v1469 = vunpack.c.h.b16 %v848
          %v1470 = vunpack.c.l.b16 %v849
          %v1471 = vunpack.c.h.b16 %v849
          %v1472 = vunpack.c.l.b16 %v850
          %v1473 = vunpack.c.h.b16 %v850
          %v1474 = vunpack.c.l.b16 %v851
          %v1475 = vunpack.c.h.b16 %v851
          %v1476 = vunpack.c.l.b16 %v852
          %v1477 = vunpack.c.h.b16 %v852
          %v1478 = vunpack.c.l.b16 %v853
          %v1479 = vunpack.c.h.b16 %v853
          %v1480 = vunpack.c.l.b16 %v854
          %v1481 = vunpack.c.h.b16 %v854
          %v1482 = vunpack.c.l.b16 %v855
          %v1483 = vunpack.c.h.b16 %v855
          %v1484 = vunpack.c.l.b16 %v856
          %v1485 = vunpack.c.h.b16 %v856
          %v1486 = vunpack.c.l.b16 %v857
          %v1487 = vunpack.c.h.b16 %v857
          %v1488 = vunpack.c.l.b16 %v858
          %v1489 = vunpack.c.h.b16 %v858
          %v1490 = vunpack.c.l.b16 %v859
          %v1491 = vunpack.c.h.b16 %v859
          %v1492 = vunpack.c.l.b16 %v860
          %v1493 = vunpack.c.h.b16 %v860
          %v1494 = vunpack.c.l.b16 %v861
          %v1495 = vunpack.c.h.b16 %v861
          %v1496 = vunpack.c.l.b16 %v862
          %v1497 = vunpack.c.h.b16 %v862
          %v1498 = vunpack.c.l.b16 %v863
          %v1499 = vunpack.c.h.b16 %v863
          %v1500 = vunpack.c.l.b16 %v864
          %v1501 = vunpack.c.h.b16 %v864
          %v1502 = vunpack.c.l.b16 %v865
          %v1503 = vunpack.c.h.b16 %v865
          %v1504 = vunpack.c.l.b16 %v866
          %v1505 = vunpack.c.h.b16 %v866
          %v1506 = vunpack.c.l.b16 %v867
          %v1507 = vunpack.c.h.b16 %v867
          %v1508 = vunpack.c.l.b16 %v868
          %v1509 = vunpack.c.h.b16 %v868
          %v1510 = vunpack.c.l.b16 %v869
          %v1511 = vunpack.c.h.b16 %v869
          %v1512 = vunpack.c.l.b16 %v870
          %v1513 = vunpack.c.h.b16 %v870
          %v1514 = vunpack.c.l.b16 %v871
          %v1515 = vunpack.c.h.b16 %v871
          %v1516 = vunpack.c.l.b16 %v872
          %v1517 = vunpack.c.h.b16 %v872
          %v1518 = vunpack.c.l.b16 %v873
          %v1519 = vunpack.c.h.b16 %v873
          %v1520 = vunpack.c.l.b16 %v874
          %v1521 = vunpack.c.h.b16 %v874
          %v1522 = vunpack.c.l.b16 %v875
          %v1523 = vunpack.c.h.b16 %v875
          %v1524 = vunpack.c.l.b16 %v876
          %v1525 = vunpack.c.h.b16 %v876
          %v1526 = vunpack.c.l.b16 %v877
          %v1527 = vunpack.c.h.b16 %v877
          %v1528 = vunpack.c.l.b16 %v878
          %v1529 = vunpack.c.h.b16 %v878
          %v1530 = vunpack.c.l.b16 %v879
          %v1531 = vunpack.c.h.b16 %v879
          %v1532 = vunpack.c.l.b16 %v880
          %v1533 = vunpack.c.h.b16 %v880
          %v1534 = vunpack.c.l.b16 %v881
          %v1535 = vunpack.c.h.b16 %v881
          %v1536 = vunpack.c.l.b16 %v882
          %v1537 = vunpack.c.h.b16 %v882
          %v1538 = vunpack.c.l.b16 %v883
          %v1539 = vunpack.c.h.b16 %v883
          %v1540 = vunpack.c.l.b16 %v884
          %v1541 = vunpack.c.h.b16 %v884
          %v1542 = vunpack.c.l.b16 %v885
          %v1543 = vunpack.c.h.b16 %v885
          %v1544 = vunpack.c.l.b16 %v886
          %v1545 = vunpack.c.h.b16 %v886
          %v1546 = vunpack.c.l.b16 %v887
          %v1547 = vunpack.c.h.b16 %v887
          %v1548 = vunpack.c.l.b16 %v888
          %v1549 = vunpack.c.h.b16 %v888
          %v1550 = vunpack.c.l.b16 %v889
          %v1551 = vunpack.c.h.b16 %v889
          %v1552 = vunpack.c.l.b16 %v890
          %v1553 = vunpack.c.h.b16 %v890
          %v1554 = vunpack.c.l.b16 %v891
          %v1555 = vunpack.c.h.b16 %v891
          %v1556 = vunpack.c.l.b16 %v892
          %v1557 = vunpack.c.h.b16 %v892
          %v1558 = vunpack.c.l.b16 %v893
          %v1559 = vunpack.c.h.b16 %v893
          %v1560 = vunpack.c.l.b16 %v894
          %v1561 = vunpack.c.h.b16 %v894
          %v1562 = vunpack.c.l.b16 %v895
          %v1563 = vunpack.c.h.b16 %v895
          %v1564 = vunpack.c.l.b16 %v896
          %v1565 = vunpack.c.h.b16 %v896
          %v1566 = vunpack.c.l.b16 %v897
          %v1567 = vunpack.c.h.b16 %v897
          %v1568 = vunpack.c.l.b16 %v898
          %v1569 = vunpack.c.h.b16 %v898
          %v1570 = vunpack.c.l.b16 %v899
          %v1571 = vunpack.c.h.b16 %v899
          %v1572 = vunpack.c.l.b16 %v900
          %v1573 = vunpack.c.h.b16 %v900
          %v1574 = vunpack.c.l.b16 %v901
          %v1575 = vunpack.c.h.b16 %v901
          %v1576 = vunpack.c.l.b16 %v902
          %v1577 = vunpack.c.h.b16 %v902
          %v1578 = vunpack.c.l.b16 %v903
          %v1579 = vunpack.c.h.b16 %v903
          %v1580 = vunpack.c.l.b16 %v904
          %v1581 = vunpack.c.h.b16 %v904
          %v1582 = vunpack.c.l.b16 %v905
          %v1583 = vunpack.c.h.b16 %v905
          %v1584 = vunpack.c.l.b16 %v906
          %v1585 = vunpack.c.h.b16 %v906
          %v1586 = vunpack.c.l.b16 %v907
          %v1587 = vunpack.c.h.b16 %v907
          %v1588 = vunpack.c.l.b16 %v908
          %v1589 = vunpack.c.h.b16 %v908
          %v1590 = vunpack.c.l.b16 %v909
          %v1591 = vunpack.c.h.b16 %v909
          %v1592 = vunpack.c.l.b16 %v910
          %v1593 = vunpack.c.h.b16 %v910
          %v1594 = vunpack.c.l.b16 %v911
          %v1595 = vunpack.c.h.b16 %v911
          %v1596 = vunpack.c.l.b16 %v912
          %v1597 = vunpack.c.h.b16 %v912
          %v1598 = vunpack.c.l.b16 %v913
          %v1599 = vunpack.c.h.b16 %v913
          %v1600 = vunpack.c.l.b16 %v914
          %v1601 = vunpack.c.h.b16 %v914
          %v1602 = vunpack.c.l.b16 %v915
          %v1603 = vunpack.c.h.b16 %v915
          %v1604 = vunpack.c.l.b16 %v916
          %v1605 = vunpack.c.h.b16 %v916
          %v1606 = vunpack.c.l.b16 %v917
          %v1607 = vunpack.c.h.b16 %v917
          %v1608 = vunpack.c.l.b16 %v918
          %v1609 = vunpack.c.h.b16 %v918
          %v1610 = vunpack.c.l.b16 %v919
          %v1611 = vunpack.c.h.b16 %v919
          %v1612 = vunpack.c.l.b16 %v920
          %v1613 = vunpack.c.h.b16 %v920
          %v1614 = vunpack.c.l.b16 %v921
          %v1615 = vunpack.c.h.b16 %v921
          %v1616 = vunpack.c.l.b16 %v922
          %v1617 = vunpack.c.h.b16 %v922
          %v1618 = vunpack.c.l.b16 %v923
          %v1619 = vunpack.c.h.b16 %v923
          %v1620 = vunpack.c.l.b16 %v924
          %v1621 = vunpack.c.h.b16 %v924
          %v1622 = vunpack.c.l.b16 %v925
          %v1623 = vunpack.c.h.b16 %v925
          %v1624 = vunpack.c.l.b16 %v926
          %v1625 = vunpack.c.h.b16 %v926
          %v1626 = vunpack.c.l.b16 %v927
          %v1627 = vunpack.c.h.b16 %v927
          %v1628 = vunpack.c.l.b16 %v928
          %v1629 = vunpack.c.h.b16 %v928
          %v1630 = vunpack.c.l.b16 %v929
          %v1631 = vunpack.c.h.b16 %v929
          %v1632 = vunpack.c.l.b16 %v930
          %v1633 = vunpack.c.h.b16 %v930
          %v1634 = vunpack.c.l.b16 %v931
          %v1635 = vunpack.c.h.b16 %v931
          %v1636 = vunpack.c.l.b16 %v932
          %v1637 = vunpack.c.h.b16 %v932
          %v1638 = vunpack.c.l.b16 %v933
          %v1639 = vunpack.c.h.b16 %v933
          %v1640 = vunpack.c.l.b16 %v934
          %v1641 = vunpack.c.h.b16 %v934
          %v1642 = vunpack.c.l.b16 %v935
          %v1643 = vunpack.c.h.b16 %v935
          %v1644 = vunpack.c.l.b16 %v936
          %v1645 = vunpack.c.h.b16 %v936
          %v1646 = vunpack.c.l.b16 %v937
          %v1647 = vunpack.c.h.b16 %v937
          %v1648 = vunpack.c.l.b16 %v938
          %v1649 = vunpack.c.h.b16 %v938
          %v1650 = vunpack.c.l.b16 %v939
          %v1651 = vunpack.c.h.b16 %v939
          %v1652 = vunpack.c.l.b16 %v940
          %v1653 = vunpack.c.h.b16 %v940
          %v1654 = vunpack.c.l.b16 %v941
          %v1655 = vunpack.c.h.b16 %v941
          %v1656 = vunpack.c.l.b16 %v942
          %v1657 = vunpack.c.h.b16 %v942
          %v1658 = vunpack.c.l.b16 %v943
          %v1659 = vunpack.c.h.b16 %v943
          %v1660 = vunpack.c.l.b16 %v944
          %v1661 = vunpack.c.h.b16 %v944
          %v1662 = vunpack.c.l.b16 %v945
          %v1663 = vunpack.c.h.b16 %v945
          %v1664 = vunpack.c.l.b16 %v946
          %v1665 = vunpack.c.h.b16 %v946
          %v1666 = vunpack.c.l.b16 %v947
          %v1667 = vunpack.c.h.b16 %v947
          %v1668 = vunpack.c.l.b16 %v948
          %v1669 = vunpack.c.h.b16 %v948
          %v1670 = vunpack.c.l.b16 %v949
          %v1671 = vunpack.c.h.b16 %v949
          %v1672 = vunpack.c.l.b16 %v950
          %v1673 = vunpack.c.h.b16 %v950
          %v1674 = vunpack.c.l.b16 %v951
          %v1675 = vunpack.c.h.b16 %v951
          %v1676 = vunpack.c.l.b16 %v952
          %v1677 = vunpack.c.h.b16 %v952
          %v1678 = vunpack.c.l.b16 %v953
          %v1679 = vunpack.c.h.b16 %v953
          %v1680 = vunpack.c.l.b16 %v954
          %v1681 = vunpack.c.h.b16 %v954
          %v1682 = vunpack.c.l.b16 %v955
          %v1683 = vunpack.c.h.b16 %v955
          %v1684 = vunpack.c.l.b16 %v956
          %v1685 = vunpack.c.h.b16 %v956
          %v1686 = vunpack.c.l.b16 %v957
          %v1687 = vunpack.c.h.b16 %v957
          %v1688 = vunpack.c.l.b16 %v958
          %v1689 = vunpack.c.h.b16 %v958
          %v1690 = vunpack.c.l.b16 %v959
          %v1691 = vunpack.c.h.b16 %v959
          %v1692 = vunpack.c.l.b16 %v960
          %v1693 = vunpack.c.h.b16 %v960
          %v1694 = vunpack.c.l.b16 %v961
          %v1695 = vunpack.c.h.b16 %v961
          %v1696 = vunpack.c.l.b16 %v962
          %v1697 = vunpack.c.h.b16 %v962
          %v1698 = vunpack.c.l.b16 %v963
          %v1699 = vunpack.c.h.b16 %v963
          %v1700 = vunpack.c.l.b16 %v964
          %v1701 = vunpack.c.h.b16 %v964
          %v1702 = vunpack.c.l.b16 %v965
          %v1703 = vunpack.c.h.b16 %v965
          %v1704 = vunpack.c.l.b16 %v966
          %v1705 = vunpack.c.h.b16 %v966
          %v1706 = vunpack.c.l.b16 %v967
          %v1707 = vunpack.c.h.b16 %v967
          %v1708 = vunpack.c.l.b16 %v968
          %v1709 = vunpack.c.h.b16 %v968
          %v1710 = vunpack.c.l.b16 %v969
          %v1711 = vunpack.c.h.b16 %v969
          %v1712 = vunpack.c.l.b16 %v970
          %v1713 = vunpack.c.h.b16 %v970
          %v1714 = vunpack.c.l.b16 %v971
          %v1715 = vunpack.c.h.b16 %v971
          %v1716 = vunpack.c.l.b16 %v972
          %v1717 = vunpack.c.h.b16 %v972
          %v1718 = vunpack.c.l.b16 %v973
          %v1719 = vunpack.c.h.b16 %v973
          %v1720 = vunpack.c.l.b16 %v974
          %v1721 = vunpack.c.h.b16 %v974
          %v1722 = vunpack.c.l.b16 %v975
          %v1723 = vunpack.c.h.b16 %v975
          %v1724 = vunpack.c.l.b16 %v976
          %v1725 = vunpack.c.h.b16 %v976
          %v1726 = vunpack.c.l.b16 %v977
          %v1727 = vunpack.c.h.b16 %v977
          %v1728 = vunpack.c.l.b16 %v978
          %v1729 = vunpack.c.h.b16 %v978
          %v1730 = vunpack.c.l.b16 %v979
          %v1731 = vunpack.c.h.b16 %v979
          %v1732 = vunpack.c.l.b16 %v980
          %v1733 = vunpack.c.h.b16 %v980
          %v1734 = vunpack.c.l.b16 %v981
          %v1735 = vunpack.c.h.b16 %v981
          %v1736 = vunpack.c.l.b16 %v982
          %v1737 = vunpack.c.h.b16 %v982
          %v1738 = vunpack.c.l.b16 %v983
          %v1739 = vunpack.c.h.b16 %v983
          %v1740 = vunpack.c.l.b16 %v984
          %v1741 = vunpack.c.h.b16 %v984
          %v1742 = vunpack.c.l.b16 %v985
          %v1743 = vunpack.c.h.b16 %v985
          %v1744 = vunpack.c.l.b16 %v986
          %v1745 = vunpack.c.h.b16 %v986
          %v1746 = vunpack.c.l.b16 %v987
          %v1747 = vunpack.c.h.b16 %v987
          %v1748 = vunpack.c.l.b16 %v988
          %v1749 = vunpack.c.h.b16 %v988
          %v1750 = vunpack.c.l.b16 %v989
          %v1751 = vunpack.c.h.b16 %v989
          %v1752 = vunpack.c.l.b16 %v990
          %v1753 = vunpack.c.h.b16 %v990
          %v1754 = vunpack.c.l.b16 %v991
          %v1755 = vunpack.c.h.b16 %v991
          %v1756 = vunpack.c.l.b16 %v992
          %v1757 = vunpack.c.h.b16 %v992
          %v1758 = vunpack.c.l.b16 %v993
          %v1759 = vunpack.c.h.b16 %v993
          %v1760 = vunpack.c.l.b16 %v994
          %v1761 = vunpack.c.h.b16 %v994
          %v1762 = vunpack.c.l.b16 %v995
          %v1763 = vunpack.c.h.b16 %v995
          %v1764 = vpack.c.b16 %v1256, %v1252
          %v1765 = vpack.c.b16 %v1257, %v1253
          %v1766 = vpack.c.b16 %v1258, %v1254
          %v1767 = vpack.c.b16 %v1259, %v1255
          %v1768 = vpack.c.b16 %v1264, %v1260
          %v1769 = vpack.c.b16 %v1265, %v1261
          %v1770 = vpack.c.b16 %v1266, %v1262
          %v1771 = vpack.c.b16 %v1267, %v1263
          %v1772 = vpack.c.b16 %v1272, %v1268
          %v1773 = vpack.c.b16 %v1273, %v1269
          %v1774 = vpack.c.b16 %v1274, %v1270
          %v1775 = vpack.c.b16 %v1275, %v1271
          %v1776 = vpack.c.b16 %v1280, %v1276
          %v1777 = vpack.c.b16 %v1281, %v1277
          %v1778 = vpack.c.b16 %v1282, %v1278
          %v1779 = vpack.c.b16 %v1283, %v1279
          %v1780 = vpack.c.b16 %v1288, %v1284
          %v1781 = vpack.c.b16 %v1289, %v1285
          %v1782 = vpack.c.b16 %v1290, %v1286
          %v1783 = vpack.c.b16 %v1291, %v1287
          %v1784 = vpack.c.b16 %v1296, %v1292
          %v1785 = vpack.c.b16 %v1297, %v1293
          %v1786 = vpack.c.b16 %v1298, %v1294
          %v1787 = vpack.c.b16 %v1299, %v1295
          %v1788 = vpack.c.b16 %v1304, %v1300
          %v1789 = vpack.c.b16 %v1305, %v1301
          %v1790 = vpack.c.b16 %v1306, %v1302
          %v1791 = vpack.c.b16 %v1307, %v1303
          %v1792 = vpack.c.b16 %v1312, %v1308
          %v1793 = vpack.c.b16 %v1313, %v1309
          %v1794 = vpack.c.b16 %v1314, %v1310
          %v1795 = vpack.c.b16 %v1315, %v1311
          %v1796 = vpack.c.b16 %v1320, %v1316
          %v1797 = vpack.c.b16 %v1321, %v1317
          %v1798 = vpack.c.b16 %v1322, %v1318
          %v1799 = vpack.c.b16 %v1323, %v1319
          %v1800 = vpack.c.b16 %v1328, %v1324
          %v1801 = vpack.c.b16 %v1329, %v1325
          %v1802 = vpack.c.b16 %v1330, %v1326
          %v1803 = vpack.c.b16 %v1331, %v1327
          %v1804 = vpack.c.b16 %v1336, %v1332
          %v1805 = vpack.c.b16 %v1337, %v1333
          %v1806 = vpack.c.b16 %v1338, %v1334
          %v1807 = vpack.c.b16 %v1339, %v1335
          %v1808 = vpack.c.b16 %v1344, %v1340
          %v1809 = vpack.c.b16 %v1345, %v1341
          %v1810 = vpack.c.b16 %v1346, %v1342
          %v1811 = vpack.c.b16 %v1347, %v1343
          %v1812 = vpack.c.b16 %v1352, %v1348
          %v1813 = vpack.c.b16 %v1353, %v1349
          %v1814 = vpack.c.b16 %v1354, %v1350
          %v1815 = vpack.c.b16 %v1355, %v1351
          %v1816 = vpack.c.b16 %v1360, %v1356
          %v1817 = vpack.c.b16 %v1361, %v1357
          %v1818 = vpack.c.b16 %v1362, %v1358
          %v1819 = vpack.c.b16 %v1363, %v1359
          %v1820 = vpack.c.b16 %v1368, %v1364
          %v1821 = vpack.c.b16 %v1369, %v1365
          %v1822 = vpack.c.b16 %v1370, %v1366
          %v1823 = vpack.c.b16 %v1371, %v1367
          %v1824 = vpack.c.b16 %v1376, %v1372
          %v1825 = vpack.c.b16 %v1377, %v1373
          %v1826 = vpack.c.b16 %v1378, %v1374
          %v1827 = vpack.c.b16 %v1379, %v1375
          %v1828 = vpack.c.b16 %v1384, %v1380
          %v1829 = vpack.c.b16 %v1385, %v1381
          %v1830 = vpack.c.b16 %v1386, %v1382
          %v1831 = vpack.c.b16 %v1387, %v1383
          %v1832 = vpack.c.b16 %v1392, %v1388
          %v1833 = vpack.c.b16 %v1393, %v1389
          %v1834 = vpack.c.b16 %v1394, %v1390
          %v1835 = vpack.c.b16 %v1395, %v1391
          %v1836 = vpack.c.b16 %v1400, %v1396
          %v1837 = vpack.c.b16 %v1401, %v1397
          %v1838 = vpack.c.b16 %v1402, %v1398
          %v1839 = vpack.c.b16 %v1403, %v1399
          %v1840 = vpack.c.b16 %v1408, %v1404
          %v1841 = vpack.c.b16 %v1409, %v1405
          %v1842 = vpack.c.b16 %v1410, %v1406
          %v1843 = vpack.c.b16 %v1411, %v1407
          %v1844 = vpack.c.b16 %v1416, %v1412
          %v1845 = vpack.c.b16 %v1417, %v1413
          %v1846 = vpack.c.b16 %v1418, %v1414
          %v1847 = vpack.c.b16 %v1419, %v1415
          %v1848 = vpack.c.b16 %v1424, %v1420
          %v1849 = vpack.c.b16 %v1425, %v1421
          %v1850 = vpack.c.b16 %v1426, %v1422
          %v1851 = vpack.c.b16 %v1427, %v1423
          %v1852 = vpack.c.b16 %v1432, %v1428
          %v1853 = vpack.c.b16 %v1433, %v1429
          %v1854 = vpack.c.b16 %v1434, %v1430
          %v1855 = vpack.c.b16 %v1435, %v1431
          %v1856 = vpack.c.b16 %v1440, %v1436
          %v1857 = vpack.c.b16 %v1441, %v1437
          %v1858 = vpack.c.b16 %v1442, %v1438
          %v1859 = vpack.c.b16 %v1443, %v1439
          %v1860 = vpack.c.b16 %v1448, %v1444
          %v1861 = vpack.c.b16 %v1449, %v1445
          %v1862 = vpack.c.b16 %v1450, %v1446
          %v1863 = vpack.c.b16 %v1451, %v1447
          %v1864 = vpack.c.b16 %v1456, %v1452
          %v1865 = vpack.c.b16 %v1457, %v1453
          %v1866 = vpack.c.b16 %v1458, %v1454
          %v1867 = vpack.c.b16 %v1459, %v1455
          %v1868 = vpack.c.b16 %v1464, %v1460
          %v1869 = vpack.c.b16 %v1465, %v1461
          %v1870 = vpack.c.b16 %v1466, %v1462
          %v1871 = vpack.c.b16 %v1467, %v1463
          %v1872 = vpack.c.b16 %v1472, %v1468
          %v1873 = vpack.c.b16 %v1473, %v1469
          %v1874 = vpack.c.b16 %v1474, %v1470
          %v1875 = vpack.c.b16 %v1475, %v1471
          %v1876 = vpack.c.b16 %v1480, %v1476
          %v1877 = vpack.c.b16 %v1481, %v1477
          %v1878 = vpack.c.b16 %v1482, %v1478
          %v1879 = vpack.c.b16 %v1483, %v1479
          %v1880 = vpack.c.b16 %v1488, %v1484
          %v1881 = vpack.c.b16 %v1489, %v1485
          %v1882 = vpack.c.b16 %v1490, %v1486
          %v1883 = vpack.c.b16 %v1491, %v1487
          %v1884 = vpack.c.b16 %v1496, %v1492
          %v1885 = vpack.c.b16 %v1497, %v1493
          %v1886 = vpack.c.b16 %v1498, %v1494
          %v1887 = vpack.c.b16 %v1499, %v1495
          %v1888 = vpack.c.b16 %v1504, %v1500
          %v1889 = vpack.c.b16 %v1505, %v1501
          %v1890 = vpack.c.b16 %v1506, %v1502
          %v1891 = vpack.c.b16 %v1507, %v1503
          %v1892 = vpack.c.b16 %v1512, %v1508
          %v1893 = vpack.c.b16 %v1513, %v1509
          %v1894 = vpack.c.b16 %v1514, %v1510
          %v1895 = vpack.c.b16 %v1515, %v1511
          %v1896 = vpack.c.b16 %v1520, %v1516
          %v1897 = vpack.c.b16 %v1521, %v1517
          %v1898 = vpack.c.b16 %v1522, %v1518
          %v1899 = vpack.c.b16 %v1523, %v1519
          %v1900 = vpack.c.b16 %v1528, %v1524
          %v1901 = vpack.c.b16 %v1529, %v1525
          %v1902 = vpack.c.b16 %v1530, %v1526
          %v1903 = vpack.c.b16 %v1531, %v1527
          %v1904 = vpack.c.b16 %v1536, %v1532
          %v1905 = vpack.c.b16 %v1537, %v1533
          %v1906 = vpack.c.b16 %v1538, %v1534
          %v1907 = vpack.c.b16 %v1539, %v1535
          %v1908 = vpack.c.b16 %v1544, %v1540
          %v1909 = vpack.c.b16 %v1545, %v1541
          %v1910 = vpack.c.b16 %v1546, %v1542
          %v1911 = vpack.c.b16 %v1547, %v1543
          %v1912 = vpack.c.b16 %v1552, %v1548
          %v1913 = vpack.c.b16 %v1553, %v1549
          %v1914 = vpack.c.b16 %v1554, %v1550
          %v1915 = vpack.c.b16 %v1555, %v1551
          %v1916 = vpack.c.b16 %v1560, %v1556
          %v1917 = vpack.c.b16 %v1561, %v1557
          %v1918 = vpack.c.b16 %v1562, %v1558
          %v1919 = vpack.c.b16 %v1563, %v1559
          %v1920 = vpack.c.b16 %v1568, %v1564
          %v1921 = vpack.c.b16 %v1569, %v1565
          %v1922 = vpack.c.b16 %v1570, %v1566
          %v1923 = vpack.c.b16 %v1571, %v1567
          %v1924 = vpack.c.b16 %v1576, %v1572
          %v1925 = vpack.c.b16 %v1577, %v1573
          %v1926 = vpack.c.b16 %v1578, %v1574
          %v1927 = vpack.c.b16 %v1579, %v1575
          %v1928 = vpack.c.b16 %v1584, %v1580
          %v1929 = vpack.c.b16 %v1585, %v1581
          %v1930 = vpack.c.b16 %v1586, %v1582
          %v1931 = vpack.c.b16 %v1587, %v1583
          %v1932 = vpack.c.b16 %v1592, %v1588
          %v1933 = vpack.c.b16 %v1593, %v1589
          %v1934 = vpack.c.b16 %v1594, %v1590
          %v1935 = vpack.c.b16 %v1595, %v1591
          %v1936 = vpack.c.b16 %v1600, %v1596
          %v1937 = vpack.c.b16 %v1601, %v1597
          %v1938 = vpack.c.b16 %v1602, %v1598
          %v1939 = vpack.c.b16 %v1603, %v1599
          %v1940 = vpack.c.b16 %v1608, %v1604
          %v1941 = vpack.c.b16 %v1609, %v1605
          %v1942 = vpack.c.b16 %v1610, %v1606
          %v1943 = vpack.c.b16 %v1611, %v1607
          %v1944 = vpack.c.b16 %v1616, %v1612
          %v1945 = vpack.c.b16 %v1617, %v1613
          %v1946 = vpack.c.b16 %v1618, %v1614
          %v1947 = vpack.c.b16 %v1619, %v1615
          %v1948 = vpack.c.b16 %v1624, %v1620
          %v1949 = vpack.c.b16 %v1625, %v1621
          %v1950 = vpack.c.b16 %v1626, %v1622
          %v1951 = vpack.c.b16 %v1627, %v1623
          %v1952 = vpack.c.b16 %v1632, %v1628
          %v1953 = vpack.c.b16 %v1633, %v1629
          %v1954 = vpack.c.b16 %v1634, %v1630
          %v1955 = vpack.c.b16 %v1635, %v1631
          %v1956 = vpack.c.b16 %v1640, %v1636
          %v1957 = vpack.c.b16 %v1641, %v1637
          %v1958 = vpack.c.b16 %v1642, %v1638
          %v1959 = vpack.c.b16 %v1643, %v1639
          %v1960 = vpack.c.b16 %v1648, %v1644
          %v1961 = vpack.c.b16 %v1649, %v1645
          %v1962 = vpack.c.b16 %v1650, %v1646
          %v1963 = vpack.c.b16 %v1651, %v1647
          %v1964 = vpack.c.b16 %v1656, %v1652
          %v1965 = vpack.c.b16 %v1657, %v1653
          %v1966 = vpack.c.b16 %v1658, %v1654
          %v1967 = vpack.c.b16 %v1659, %v1655
          %v1968 = vpack.c.b16 %v1664, %v1660
          %v1969 = vpack.c.b16 %v1665, %v1661
          %v1970 = vpack.c.b16 %v1666, %v1662
          %v1971 = vpack.c.b16 %v1667, %v1663
          %v1972 = vpack.c.b16 %v1672, %v1668
          %v1973 = vpack.c.b16 %v1673, %v1669
          %v1974 = vpack.c.b16 %v1674, %v1670
          %v1975 = vpack.c.b16 %v1675, %v1671
          %v1976 = vpack.c.b16 %v1680, %v1676
          %v1977 = vpack.c.b16 %v1681, %v1677
          %v1978 = vpack.c.b16 %v1682, %v1678
          %v1979 = vpack.c.b16 %v1683, %v1679
          %v1980 = vpack.c.b16 %v1688, %v1684
          %v1981 = vpack.c.b16 %v1689, %v1685
          %v1982 = vpack.c.b16 %v1690, %v1686
          %v1983 = vpack.c.b16 %v1691, %v1687
          %v1984 = vpack.c.b16 %v1696, %v1692
          %v1985 = vpack.c.b16 %v1697, %v1693
          %v1986 = vpack.c.b16 %v1698, %v1694
          %v1987 = vpack.c.b16 %v1699, %v1695
          %v1988 = vpack.c.b16 %v1704, %v1700
          %v1989 = vpack.c.b16 %v1705, %v1701
          %v1990 = vpack.c.b16 %v1706, %v1702
          %v1991 = vpack.c.b16 %v1707, %v1703
          %v1992 = vpack.c.b16 %v1712, %v1708
          %v1993 = vpack.c.b16 %v1713, %v1709
          %v1994 = vpack.c.b16 %v1714, %v1710
          %v1995 = vpack.c.b16 %v1715, %v1711
          %v1996 = vpack.c.b16 %v1720, %v1716
          %v1997 = vpack.c.b16 %v1721, %v1717
          %v1998 = vpack.c.b16 %v1722, %v1718
          %v1999 = vpack.c.b16 %v1723, %v1719
          %v2000 = vpack.c.b16 %v1728, %v1724
          %v2001 = vpack.c.b16 %v1729, %v1725
          %v2002 = vpack.c.b16 %v1730, %v1726
          %v2003 = vpack.c.b16 %v1731, %v1727
          %v2004 = vpack.c.b16 %v1736, %v1732
          %v2005 = vpack.c.b16 %v1737, %v1733
          %v2006 = vpack.c.b16 %v1738, %v1734
          %v2007 = vpack.c.b16 %v1739, %v1735
          %v2008 = vpack.c.b16 %v1744, %v1740
          %v2009 = vpack.c.b16 %v1745, %v1741
          %v2010 = vpack.c.b16 %v1746, %v1742
          %v2011 = vpack.c.b16 %v1747, %v1743
          %v2012 = vpack.c.b16 %v1752, %v1748
          %v2013 = vpack.c.b16 %v1753, %v1749
          %v2014 = vpack.c.b16 %v1754, %v1750
          %v2015 = vpack.c.b16 %v1755, %v1751
          %v2016 = vpack.c.b16 %v1760, %v1756
          %v2017 = vpack.c.b16 %v1761, %v1757
          %v2018 = vpack.c.b16 %v1762, %v1758
          %v2019 = vpack.c.b16 %v1763, %v1759
          %2276 = vmatpush.bf16.msra.mxu0 %v1792
          %2277 = vmatpush.bf16.msra.mxu0 %v1788
          %2278 = vmatpush.bf16.msra.mxu0 %v1784
          %2279 = vmatpush.bf16.msra.mxu0 %v1780
          %2280 = vmatpush.bf16.msra.mxu0 %v1776
          %2281 = vmatpush.bf16.msra.mxu0 %v1772
          %2282 = vmatpush.bf16.msra.mxu0 %v1768
          %2283 = vmatpush.bf16.msra.mxu0 %v1764
          %2284 = vmatmul.bf16.gmra.mxu0 %v732
          %v2285 = vpop.f32.mrf.mxu0
          %v2286 = vadd.f32 0.0, %v2285
          %v2287 = vpop.f32.mrf.mxu0
          %2288 = vdwg.mxu0
          %2289 = vmatpush.bf16.msra.mxu0 %v1824
          %2290 = vmatpush.bf16.msra.mxu0 %v1820
          %2291 = vmatpush.bf16.msra.mxu0 %v1816
          %2292 = vmatpush.bf16.msra.mxu0 %v1812
          %2293 = vmatpush.bf16.msra.mxu0 %v1808
          %2294 = vmatpush.bf16.msra.mxu0 %v1804
          %2295 = vmatpush.bf16.msra.mxu0 %v1800
          %2296 = vmatpush.bf16.msra.mxu0 %v1796
          %2297 = vmatmul.bf16.gmra.mxu0 %v733
          %v2298 = vpop.f32.mrf.mxu0
          %v2299 = vadd.f32 %v2286, %v2298
          %v2300 = vpop.f32.mrf.mxu0
          %2301 = vdwg.mxu0
          %2302 = vmatpush.bf16.msra.mxu0 %v1856
          %2303 = vmatpush.bf16.msra.mxu0 %v1852
          %2304 = vmatpush.bf16.msra.mxu0 %v1848
          %2305 = vmatpush.bf16.msra.mxu0 %v1844
          %2306 = vmatpush.bf16.msra.mxu0 %v1840
          %2307 = vmatpush.bf16.msra.mxu0 %v1836
          %2308 = vmatpush.bf16.msra.mxu0 %v1832
          %2309 = vmatpush.bf16.msra.mxu0 %v1828
          %2310 = vmatmul.bf16.gmra.mxu0 %v734
          %v2311 = vpop.f32.mrf.mxu0
          %v2312 = vadd.f32 %v2299, %v2311
          %v2313 = vpop.f32.mrf.mxu0
          %2314 = vdwg.mxu0
          %2315 = vmatpush.bf16.msra.mxu0 %v1888
          %2316 = vmatpush.bf16.msra.mxu0 %v1884
          %2317 = vmatpush.bf16.msra.mxu0 %v1880
          %2318 = vmatpush.bf16.msra.mxu0 %v1876
          %2319 = vmatpush.bf16.msra.mxu0 %v1872
          %2320 = vmatpush.bf16.msra.mxu0 %v1868
          %2321 = vmatpush.bf16.msra.mxu0 %v1864
          %2322 = vmatpush.bf16.msra.mxu0 %v1860
          %2323 = vmatmul.bf16.gmra.mxu0 %v735
          %v2324 = vpop.f32.mrf.mxu0
          %v2325 = vadd.f32 %v2312, %v2324
          %v2326 = vpop.f32.mrf.mxu0
          %2327 = vdwg.mxu0
          %2328 = vmatpush.bf16.msra.mxu0 %v1920
          %2329 = vmatpush.bf16.msra.mxu0 %v1916
          %2330 = vmatpush.bf16.msra.mxu0 %v1912
          %2331 = vmatpush.bf16.msra.mxu0 %v1908
          %2332 = vmatpush.bf16.msra.mxu0 %v1904
          %2333 = vmatpush.bf16.msra.mxu0 %v1900
          %2334 = vmatpush.bf16.msra.mxu0 %v1896
          %2335 = vmatpush.bf16.msra.mxu0 %v1892
          %2336 = vmatmul.bf16.gmra.mxu0 %v736
          %v2337 = vpop.f32.mrf.mxu0
          %v2338 = vadd.f32 %v2325, %v2337
          %v2339 = vpop.f32.mrf.mxu0
          %2340 = vdwg.mxu0
          %2341 = vmatpush.bf16.msra.mxu0 %v1952
          %2342 = vmatpush.bf16.msra.mxu0 %v1948
          %2343 = vmatpush.bf16.msra.mxu0 %v1944
          %2344 = vmatpush.bf16.msra.mxu0 %v1940
          %2345 = vmatpush.bf16.msra.mxu0 %v1936
          %2346 = vmatpush.bf16.msra.mxu0 %v1932
          %2347 = vmatpush.bf16.msra.mxu0 %v1928
          %2348 = vmatpush.bf16.msra.mxu0 %v1924
          %2349 = vmatmul.bf16.gmra.mxu0 %v737
          %v2350 = vpop.f32.mrf.mxu0
          %v2351 = vadd.f32 %v2338, %v2350
          %v2352 = vpop.f32.mrf.mxu0
          %2353 = vdwg.mxu0
          %2354 = vmatpush.bf16.msra.mxu0 %v1984
          %2355 = vmatpush.bf16.msra.mxu0 %v1980
          %2356 = vmatpush.bf16.msra.mxu0 %v1976
          %2357 = vmatpush.bf16.msra.mxu0 %v1972
          %2358 = vmatpush.bf16.msra.mxu0 %v1968
          %2359 = vmatpush.bf16.msra.mxu0 %v1964
          %2360 = vmatpush.bf16.msra.mxu0 %v1960
          %2361 = vmatpush.bf16.msra.mxu0 %v1956
          %2362 = vmatmul.bf16.gmra.mxu0 %v738
          %v2363 = vpop.f32.mrf.mxu0
          %v2364 = vadd.f32 %v2351, %v2363
          %v2365 = vpop.f32.mrf.mxu0
          %2366 = vdwg.mxu0
          %2367 = vmatpush.bf16.msra.mxu0 %v2016
          %2368 = vmatpush.bf16.msra.mxu0 %v2012
          %2369 = vmatpush.bf16.msra.mxu0 %v2008
          %2370 = vmatpush.bf16.msra.mxu0 %v2004
          %2371 = vmatpush.bf16.msra.mxu0 %v2000
          %2372 = vmatpush.bf16.msra.mxu0 %v1996
          %2373 = vmatpush.bf16.msra.mxu0 %v1992
          %2374 = vmatpush.bf16.msra.mxu0 %v1988
          %2375 = vmatmul.bf16.gmra.mxu0 %v739
          %v2376 = vpop.f32.mrf.mxu0
          %v2377 = vadd.f32 %v2364, %v2376
          %v2378 = vpop.f32.mrf.mxu0
          %2379 = vdwg.mxu0
          %2380 = vmatpush.bf16.msra.mxu0 %v1793
          %2381 = vmatpush.bf16.msra.mxu0 %v1789
          %2382 = vmatpush.bf16.msra.mxu0 %v1785
          %2383 = vmatpush.bf16.msra.mxu0 %v1781
          %2384 = vmatpush.bf16.msra.mxu0 %v1777
          %2385 = vmatpush.bf16.msra.mxu0 %v1773
          %2386 = vmatpush.bf16.msra.mxu0 %v1769
          %2387 = vmatpush.bf16.msra.mxu0 %v1765
          %2388 = vmatmul.bf16.gmra.mxu0 %v732
          %v2389 = vpop.f32.mrf.mxu0
          %v2390 = vadd.f32 0.0, %v2389
          %v2391 = vpop.f32.mrf.mxu0
          %2392 = vdwg.mxu0
          %2393 = vmatpush.bf16.msra.mxu0 %v1825
          %2394 = vmatpush.bf16.msra.mxu0 %v1821
          %2395 = vmatpush.bf16.msra.mxu0 %v1817
          %2396 = vmatpush.bf16.msra.mxu0 %v1813
          %2397 = vmatpush.bf16.msra.mxu0 %v1809
          %2398 = vmatpush.bf16.msra.mxu0 %v1805
          %2399 = vmatpush.bf16.msra.mxu0 %v1801
          %2400 = vmatpush.bf16.msra.mxu0 %v1797
          %2401 = vmatmul.bf16.gmra.mxu0 %v733
          %v2402 = vpop.f32.mrf.mxu0
          %v2403 = vadd.f32 %v2390, %v2402
          %v2404 = vpop.f32.mrf.mxu0
          %2405 = vdwg.mxu0
          %2406 = vmatpush.bf16.msra.mxu0 %v1857
          %2407 = vmatpush.bf16.msra.mxu0 %v1853
          %2408 = vmatpush.bf16.msra.mxu0 %v1849
          %2409 = vmatpush.bf16.msra.mxu0 %v1845
          %2410 = vmatpush.bf16.msra.mxu0 %v1841
          %2411 = vmatpush.bf16.msra.mxu0 %v1837
          %2412 = vmatpush.bf16.msra.mxu0 %v1833
          %2413 = vmatpush.bf16.msra.mxu0 %v1829
          %2414 = vmatmul.bf16.gmra.mxu0 %v734
          %v2415 = vpop.f32.mrf.mxu0
          %v2416 = vadd.f32 %v2403, %v2415
          %v2417 = vpop.f32.mrf.mxu0
          %2418 = vdwg.mxu0
          %2419 = vmatpush.bf16.msra.mxu0 %v1889
          %2420 = vmatpush.bf16.msra.mxu0 %v1885
          %2421 = vmatpush.bf16.msra.mxu0 %v1881
          %2422 = vmatpush.bf16.msra.mxu0 %v1877
          %2423 = vmatpush.bf16.msra.mxu0 %v1873
          %2424 = vmatpush.bf16.msra.mxu0 %v1869
          %2425 = vmatpush.bf16.msra.mxu0 %v1865
          %2426 = vmatpush.bf16.msra.mxu0 %v1861
          %2427 = vmatmul.bf16.gmra.mxu0 %v735
          %v2428 = vpop.f32.mrf.mxu0
          %v2429 = vadd.f32 %v2416, %v2428
          %v2430 = vpop.f32.mrf.mxu0
          %2431 = vdwg.mxu0
          %2432 = vmatpush.bf16.msra.mxu0 %v1921
          %2433 = vmatpush.bf16.msra.mxu0 %v1917
          %2434 = vmatpush.bf16.msra.mxu0 %v1913
          %2435 = vmatpush.bf16.msra.mxu0 %v1909
          %2436 = vmatpush.bf16.msra.mxu0 %v1905
          %2437 = vmatpush.bf16.msra.mxu0 %v1901
          %2438 = vmatpush.bf16.msra.mxu0 %v1897
          %2439 = vmatpush.bf16.msra.mxu0 %v1893
          %2440 = vmatmul.bf16.gmra.mxu0 %v736
          %v2441 = vpop.f32.mrf.mxu0
          %v2442 = vadd.f32 %v2429, %v2441
          %v2443 = vpop.f32.mrf.mxu0
          %2444 = vdwg.mxu0
          %2445 = vmatpush.bf16.msra.mxu0 %v1953
          %2446 = vmatpush.bf16.msra.mxu0 %v1949
          %2447 = vmatpush.bf16.msra.mxu0 %v1945
          %2448 = vmatpush.bf16.msra.mxu0 %v1941
          %2449 = vmatpush.bf16.msra.mxu0 %v1937
          %2450 = vmatpush.bf16.msra.mxu0 %v1933
          %2451 = vmatpush.bf16.msra.mxu0 %v1929
          %2452 = vmatpush.bf16.msra.mxu0 %v1925
          %2453 = vmatmul.bf16.gmra.mxu0 %v737
          %v2454 = vpop.f32.mrf.mxu0
          %v2455 = vadd.f32 %v2442, %v2454
          %v2456 = vpop.f32.mrf.mxu0
          %2457 = vdwg.mxu0
          %2458 = vmatpush.bf16.msra.mxu0 %v1985
          %2459 = vmatpush.bf16.msra.mxu0 %v1981
          %2460 = vmatpush.bf16.msra.mxu0 %v1977
          %2461 = vmatpush.bf16.msra.mxu0 %v1973
          %2462 = vmatpush.bf16.msra.mxu0 %v1969
          %2463 = vmatpush.bf16.msra.mxu0 %v1965
          %2464 = vmatpush.bf16.msra.mxu0 %v1961
          %2465 = vmatpush.bf16.msra.mxu0 %v1957
          %2466 = vmatmul.bf16.gmra.mxu0 %v738
          %v2467 = vpop.f32.mrf.mxu0
          %v2468 = vadd.f32 %v2455, %v2467
          %v2469 = vpop.f32.mrf.mxu0
          %2470 = vdwg.mxu0
          %2471 = vmatpush.bf16.msra.mxu0 %v2017
          %2472 = vmatpush.bf16.msra.mxu0 %v2013
          %2473 = vmatpush.bf16.msra.mxu0 %v2009
          %2474 = vmatpush.bf16.msra.mxu0 %v2005
          %2475 = vmatpush.bf16.msra.mxu0 %v2001
          %2476 = vmatpush.bf16.msra.mxu0 %v1997
          %2477 = vmatpush.bf16.msra.mxu0 %v1993
          %2478 = vmatpush.bf16.msra.mxu0 %v1989
          %2479 = vmatmul.bf16.gmra.mxu0 %v739
          %v2480 = vpop.f32.mrf.mxu0
          %v2481 = vadd.f32 %v2468, %v2480
          %v2482 = vpop.f32.mrf.mxu0
          %2483 = vdwg.mxu0
          %2484 = vmatpush.bf16.msra.mxu0 %v1794
          %2485 = vmatpush.bf16.msra.mxu0 %v1790
          %2486 = vmatpush.bf16.msra.mxu0 %v1786
          %2487 = vmatpush.bf16.msra.mxu0 %v1782
          %2488 = vmatpush.bf16.msra.mxu0 %v1778
          %2489 = vmatpush.bf16.msra.mxu0 %v1774
          %2490 = vmatpush.bf16.msra.mxu0 %v1770
          %2491 = vmatpush.bf16.msra.mxu0 %v1766
          %2492 = vmatmul.bf16.gmra.mxu0 %v732
          %v2493 = vpop.f32.mrf.mxu0
          %v2494 = vadd.f32 0.0, %v2493
          %v2495 = vpop.f32.mrf.mxu0
          %2496 = vdwg.mxu0
          %2497 = vmatpush.bf16.msra.mxu0 %v1826
          %2498 = vmatpush.bf16.msra.mxu0 %v1822
          %2499 = vmatpush.bf16.msra.mxu0 %v1818
          %2500 = vmatpush.bf16.msra.mxu0 %v1814
          %2501 = vmatpush.bf16.msra.mxu0 %v1810
          %2502 = vmatpush.bf16.msra.mxu0 %v1806
          %2503 = vmatpush.bf16.msra.mxu0 %v1802
          %2504 = vmatpush.bf16.msra.mxu0 %v1798
          %2505 = vmatmul.bf16.gmra.mxu0 %v733
          %v2506 = vpop.f32.mrf.mxu0
          %v2507 = vadd.f32 %v2494, %v2506
          %v2508 = vpop.f32.mrf.mxu0
          %2509 = vdwg.mxu0
          %2510 = vmatpush.bf16.msra.mxu0 %v1858
          %2511 = vmatpush.bf16.msra.mxu0 %v1854
          %2512 = vmatpush.bf16.msra.mxu0 %v1850
          %2513 = vmatpush.bf16.msra.mxu0 %v1846
          %2514 = vmatpush.bf16.msra.mxu0 %v1842
          %2515 = vmatpush.bf16.msra.mxu0 %v1838
          %2516 = vmatpush.bf16.msra.mxu0 %v1834
          %2517 = vmatpush.bf16.msra.mxu0 %v1830
          %2518 = vmatmul.bf16.gmra.mxu0 %v734
          %v2519 = vpop.f32.mrf.mxu0
          %v2520 = vadd.f32 %v2507, %v2519
          %v2521 = vpop.f32.mrf.mxu0
          %2522 = vdwg.mxu0
          %2523 = vmatpush.bf16.msra.mxu0 %v1890
          %2524 = vmatpush.bf16.msra.mxu0 %v1886
          %2525 = vmatpush.bf16.msra.mxu0 %v1882
          %2526 = vmatpush.bf16.msra.mxu0 %v1878
          %2527 = vmatpush.bf16.msra.mxu0 %v1874
          %2528 = vmatpush.bf16.msra.mxu0 %v1870
          %2529 = vmatpush.bf16.msra.mxu0 %v1866
          %2530 = vmatpush.bf16.msra.mxu0 %v1862
          %2531 = vmatmul.bf16.gmra.mxu0 %v735
          %v2532 = vpop.f32.mrf.mxu0
          %v2533 = vadd.f32 %v2520, %v2532
          %v2534 = vpop.f32.mrf.mxu0
          %2535 = vdwg.mxu0
          %2536 = vmatpush.bf16.msra.mxu0 %v1922
          %2537 = vmatpush.bf16.msra.mxu0 %v1918
          %2538 = vmatpush.bf16.msra.mxu0 %v1914
          %2539 = vmatpush.bf16.msra.mxu0 %v1910
          %2540 = vmatpush.bf16.msra.mxu0 %v1906
          %2541 = vmatpush.bf16.msra.mxu0 %v1902
          %2542 = vmatpush.bf16.msra.mxu0 %v1898
          %2543 = vmatpush.bf16.msra.mxu0 %v1894
          %2544 = vmatmul.bf16.gmra.mxu0 %v736
          %v2545 = vpop.f32.mrf.mxu0
          %v2546 = vadd.f32 %v2533, %v2545
          %v2547 = vpop.f32.mrf.mxu0
          %2548 = vdwg.mxu0
          %2549 = vmatpush.bf16.msra.mxu0 %v1954
          %2550 = vmatpush.bf16.msra.mxu0 %v1950
          %2551 = vmatpush.bf16.msra.mxu0 %v1946
          %2552 = vmatpush.bf16.msra.mxu0 %v1942
          %2553 = vmatpush.bf16.msra.mxu0 %v1938
          %2554 = vmatpush.bf16.msra.mxu0 %v1934
          %2555 = vmatpush.bf16.msra.mxu0 %v1930
          %2556 = vmatpush.bf16.msra.mxu0 %v1926
          %2557 = vmatmul.bf16.gmra.mxu0 %v737
          %v2558 = vpop.f32.mrf.mxu0
          %v2559 = vadd.f32 %v2546, %v2558
          %v2560 = vpop.f32.mrf.mxu0
          %2561 = vdwg.mxu0
          %2562 = vmatpush.bf16.msra.mxu0 %v1986
          %2563 = vmatpush.bf16.msra.mxu0 %v1982
          %2564 = vmatpush.bf16.msra.mxu0 %v1978
          %2565 = vmatpush.bf16.msra.mxu0 %v1974
          %2566 = vmatpush.bf16.msra.mxu0 %v1970
          %2567 = vmatpush.bf16.msra.mxu0 %v1966
          %2568 = vmatpush.bf16.msra.mxu0 %v1962
          %2569 = vmatpush.bf16.msra.mxu0 %v1958
          %2570 = vmatmul.bf16.gmra.mxu0 %v738
          %v2571 = vpop.f32.mrf.mxu0
          %v2572 = vadd.f32 %v2559, %v2571
          %v2573 = vpop.f32.mrf.mxu0
          %2574 = vdwg.mxu0
          %2575 = vmatpush.bf16.msra.mxu0 %v2018
          %2576 = vmatpush.bf16.msra.mxu0 %v2014
          %2577 = vmatpush.bf16.msra.mxu0 %v2010
          %2578 = vmatpush.bf16.msra.mxu0 %v2006
          %2579 = vmatpush.bf16.msra.mxu0 %v2002
          %2580 = vmatpush.bf16.msra.mxu0 %v1998
          %2581 = vmatpush.bf16.msra.mxu0 %v1994
          %2582 = vmatpush.bf16.msra.mxu0 %v1990
          %2583 = vmatmul.bf16.gmra.mxu0 %v739
          %v2584 = vpop.f32.mrf.mxu0
          %v2585 = vadd.f32 %v2572, %v2584
          %v2586 = vpop.f32.mrf.mxu0
          %2587 = vdwg.mxu0
          %2588 = vmatpush.bf16.msra.mxu0 %v1795
          %2589 = vmatpush.bf16.msra.mxu0 %v1791
          %2590 = vmatpush.bf16.msra.mxu0 %v1787
          %2591 = vmatpush.bf16.msra.mxu0 %v1783
          %2592 = vmatpush.bf16.msra.mxu0 %v1779
          %2593 = vmatpush.bf16.msra.mxu0 %v1775
          %2594 = vmatpush.bf16.msra.mxu0 %v1771
          %2595 = vmatpush.bf16.msra.mxu0 %v1767
          %2596 = vmatmul.bf16.gmra.mxu0 %v732
          %v2597 = vpop.f32.mrf.mxu0
          %v2598 = vadd.f32 0.0, %v2597
          %v2599 = vpop.f32.mrf.mxu0
          %2600 = vdwg.mxu0
          %2601 = vmatpush.bf16.msra.mxu0 %v1827
          %2602 = vmatpush.bf16.msra.mxu0 %v1823
          %2603 = vmatpush.bf16.msra.mxu0 %v1819
          %2604 = vmatpush.bf16.msra.mxu0 %v1815
          %2605 = vmatpush.bf16.msra.mxu0 %v1811
          %2606 = vmatpush.bf16.msra.mxu0 %v1807
          %2607 = vmatpush.bf16.msra.mxu0 %v1803
          %2608 = vmatpush.bf16.msra.mxu0 %v1799
          %2609 = vmatmul.bf16.gmra.mxu0 %v733
          %v2610 = vpop.f32.mrf.mxu0
          %v2611 = vadd.f32 %v2598, %v2610
          %v2612 = vpop.f32.mrf.mxu0
          %2613 = vdwg.mxu0
          %2614 = vmatpush.bf16.msra.mxu0 %v1859
          %2615 = vmatpush.bf16.msra.mxu0 %v1855
          %2616 = vmatpush.bf16.msra.mxu0 %v1851
          %2617 = vmatpush.bf16.msra.mxu0 %v1847
          %2618 = vmatpush.bf16.msra.mxu0 %v1843
          %2619 = vmatpush.bf16.msra.mxu0 %v1839
          %2620 = vmatpush.bf16.msra.mxu0 %v1835
          %2621 = vmatpush.bf16.msra.mxu0 %v1831
          %2622 = vmatmul.bf16.gmra.mxu0 %v734
          %v2623 = vpop.f32.mrf.mxu0
          %v2624 = vadd.f32 %v2611, %v2623
          %v2625 = vpop.f32.mrf.mxu0
          %2626 = vdwg.mxu0
          %2627 = vmatpush.bf16.msra.mxu0 %v1891
          %2628 = vmatpush.bf16.msra.mxu0 %v1887
          %2629 = vmatpush.bf16.msra.mxu0 %v1883
          %2630 = vmatpush.bf16.msra.mxu0 %v1879
          %2631 = vmatpush.bf16.msra.mxu0 %v1875
          %2632 = vmatpush.bf16.msra.mxu0 %v1871
          %2633 = vmatpush.bf16.msra.mxu0 %v1867
          %2634 = vmatpush.bf16.msra.mxu0 %v1863
          %2635 = vmatmul.bf16.gmra.mxu0 %v735
          %v2636 = vpop.f32.mrf.mxu0
          %v2637 = vadd.f32 %v2624, %v2636
          %v2638 = vpop.f32.mrf.mxu0
          %2639 = vdwg.mxu0
          %2640 = vmatpush.bf16.msra.mxu0 %v1923
          %2641 = vmatpush.bf16.msra.mxu0 %v1919
          %2642 = vmatpush.bf16.msra.mxu0 %v1915
          %2643 = vmatpush.bf16.msra.mxu0 %v1911
          %2644 = vmatpush.bf16.msra.mxu0 %v1907
          %2645 = vmatpush.bf16.msra.mxu0 %v1903
          %2646 = vmatpush.bf16.msra.mxu0 %v1899
          %2647 = vmatpush.bf16.msra.mxu0 %v1895
          %2648 = vmatmul.bf16.gmra.mxu0 %v736
          %v2649 = vpop.f32.mrf.mxu0
          %v2650 = vadd.f32 %v2637, %v2649
          %v2651 = vpop.f32.mrf.mxu0
          %2652 = vdwg.mxu0
          %2653 = vmatpush.bf16.msra.mxu0 %v1955
          %2654 = vmatpush.bf16.msra.mxu0 %v1951
          %2655 = vmatpush.bf16.msra.mxu0 %v1947
          %2656 = vmatpush.bf16.msra.mxu0 %v1943
          %2657 = vmatpush.bf16.msra.mxu0 %v1939
          %2658 = vmatpush.bf16.msra.mxu0 %v1935
          %2659 = vmatpush.bf16.msra.mxu0 %v1931
          %2660 = vmatpush.bf16.msra.mxu0 %v1927
          %2661 = vmatmul.bf16.gmra.mxu0 %v737
          %v2662 = vpop.f32.mrf.mxu0
          %v2663 = vadd.f32 %v2650, %v2662
          %v2664 = vpop.f32.mrf.mxu0
          %2665 = vdwg.mxu0
          %2666 = vmatpush.bf16.msra.mxu0 %v1987
          %2667 = vmatpush.bf16.msra.mxu0 %v1983
          %2668 = vmatpush.bf16.msra.mxu0 %v1979
          %2669 = vmatpush.bf16.msra.mxu0 %v1975
          %2670 = vmatpush.bf16.msra.mxu0 %v1971
          %2671 = vmatpush.bf16.msra.mxu0 %v1967
          %2672 = vmatpush.bf16.msra.mxu0 %v1963
          %2673 = vmatpush.bf16.msra.mxu0 %v1959
          %2674 = vmatmul.bf16.gmra.mxu0 %v738
          %v2675 = vpop.f32.mrf.mxu0
          %v2676 = vadd.f32 %v2663, %v2675
          %v2677 = vpop.f32.mrf.mxu0
          %2678 = vdwg.mxu0
          %2679 = vmatpush.bf16.msra.mxu0 %v2019
          %2680 = vmatpush.bf16.msra.mxu0 %v2015
          %2681 = vmatpush.bf16.msra.mxu0 %v2011
          %2682 = vmatpush.bf16.msra.mxu0 %v2007
          %2683 = vmatpush.bf16.msra.mxu0 %v2003
          %2684 = vmatpush.bf16.msra.mxu0 %v1999
          %2685 = vmatpush.bf16.msra.mxu0 %v1995
          %2686 = vmatpush.bf16.msra.mxu0 %v1991
          %2687 = vmatmul.bf16.gmra.mxu0 %v739
          %v2688 = vpop.f32.mrf.mxu0
          %v2689 = vadd.f32 %v2676, %v2688
          %v2690 = vpop.f32.mrf.mxu0
          %2691 = vdwg.mxu0
          %v2692 = vsel %vm622, %v2377, 0.0
          %v2693 = vrot.slane %v2692, 4
          %v2694 = vadd.f32 %v2692, %v2693
          %v2695 = vrot.slane %v2694, 2
          %v2696 = vadd.f32 %v2694, %v2695
          %v2697 = vrot.slane %v2696, 1
          %v2698 = vadd.f32 %v2696, %v2697
          %v2699 = vsel %vm622, %v2481, 0.0
          %v2700 = vrot.slane %v2699, 4
          %v2701 = vadd.f32 %v2699, %v2700
          %v2702 = vrot.slane %v2701, 2
          %v2703 = vadd.f32 %v2701, %v2702
          %v2704 = vrot.slane %v2703, 1
          %v2705 = vadd.f32 %v2703, %v2704
          %v2706 = vsel %vm622, %v2585, 0.0
          %v2707 = vrot.slane %v2706, 4
          %v2708 = vadd.f32 %v2706, %v2707
          %v2709 = vrot.slane %v2708, 2
          %v2710 = vadd.f32 %v2708, %v2709
          %v2711 = vrot.slane %v2710, 1
          %v2712 = vadd.f32 %v2710, %v2711
          %v2713 = vsel %vm622, %v2689, 0.0
          %v2714 = vrot.slane %v2713, 4
          %v2715 = vadd.f32 %v2713, %v2714
          %v2716 = vrot.slane %v2715, 2
          %v2717 = vadd.f32 %v2715, %v2716
          %v2718 = vrot.slane %v2717, 1
          %v2719 = vadd.f32 %v2717, %v2718
          %v2720 = vrcp.pop 4.0
          %v2721 = vmul.f32 4.0, %v2720
          %v2722 = vsub.f32 1.0, %v2721
          %v2723 = vmul.f32 %v2720, %v2722
          %v2724 = vadd.f32 %v2720, %v2723
          %vm2725 = vweird.f32 %v2720
          %v2726 = vsel %vm2725, %v2720, %v2724
          %v2727 = vmul.f32 %v2698, %v2726
          %v2728 = vmul.f32 %v2705, %v2726
          %v2729 = vmul.f32 %v2712, %v2726
          %v2730 = vmul.f32 %v2719, %v2726
          %v2731 = vsub.f32 %v2377, %v2727
          %v2732 = vsub.f32 %v2481, %v2728
          %v2733 = vsub.f32 %v2585, %v2729
          %v2734 = vsub.f32 %v2689, %v2730
          %v2735 = vmul.f32 %v2731, %v2731
          %v2736 = vmul.f32 %v2732, %v2732
          %v2737 = vmul.f32 %v2733, %v2733
          %v2738 = vmul.f32 %v2734, %v2734
          %v2739 = vsel %vm622, %v2735, 0.0
          %v2740 = vrot.slane %v2739, 4
          %v2741 = vadd.f32 %v2739, %v2740
          %v2742 = vrot.slane %v2741, 2
          %v2743 = vadd.f32 %v2741, %v2742
          %v2744 = vrot.slane %v2743, 1
          %v2745 = vadd.f32 %v2743, %v2744
          %v2746 = vsel %vm622, %v2736, 0.0
          %v2747 = vrot.slane %v2746, 4
          %v2748 = vadd.f32 %v2746, %v2747
          %v2749 = vrot.slane %v2748, 2
          %v2750 = vadd.f32 %v2748, %v2749
          %v2751 = vrot.slane %v2750, 1
          %v2752 = vadd.f32 %v2750, %v2751
          %v2753 = vsel %vm622, %v2737, 0.0
          %v2754 = vrot.slane %v2753, 4
          %v2755 = vadd.f32 %v2753, %v2754
          %v2756 = vrot.slane %v2755, 2
          %v2757 = vadd.f32 %v2755, %v2756
          %v2758 = vrot.slane %v2757, 1
          %v2759 = vadd.f32 %v2757, %v2758
          %v2760 = vsel %vm622, %v2738, 0.0
          %v2761 = vrot.slane %v2760, 4
          %v2762 = vadd.f32 %v2760, %v2761
          %v2763 = vrot.slane %v2762, 2
          %v2764 = vadd.f32 %v2762, %v2763
          %v2765 = vrot.slane %v2764, 1
          %v2766 = vadd.f32 %v2764, %v2765
          %v2767 = vmul.f32 %v2745, %v2726
          %v2768 = vmul.f32 %v2752, %v2726
          %v2769 = vmul.f32 %v2759, %v2726
          %v2770 = vmul.f32 %v2766, %v2726
          %v2771 = vadd.f32 %v2767, 1e-05
          %v2772 = vadd.f32 %v2768, 1e-05
          %v2773 = vadd.f32 %v2769, 1e-05
          %v2774 = vadd.f32 %v2770, 1e-05
          %v2775 = vrsqrt.pop %v2771
          %v2776 = vmul.f32 %v2775, %v2771
          %v2777 = vmul.f32 %v2776, %v2775
          %v2778 = vmul.f32 0.5, %v2777
          %v2779 = vsub.f32 1.5, %v2778
          %v2780 = vmul.f32 %v2775, %v2779
          %vm2781 = vweird.f32 %v2771
          %vm2782 = vweird.f32 %v2775
          %vm2783 = vmor %vm2781, %vm2782
          %v2784 = vsel %vm2783, %v2775, %v2780
          %v2785 = vrsqrt.pop %v2772
          %v2786 = vmul.f32 %v2785, %v2772
          %v2787 = vmul.f32 %v2786, %v2785
          %v2788 = vmul.f32 0.5, %v2787
          %v2789 = vsub.f32 1.5, %v2788
          %v2790 = vmul.f32 %v2785, %v2789
          %vm2791 = vweird.f32 %v2772
          %vm2792 = vweird.f32 %v2785
          %vm2793 = vmor %vm2791, %vm2792
          %v2794 = vsel %vm2793, %v2785, %v2790
          %v2795 = vrsqrt.pop %v2773
          %v2796 = vmul.f32 %v2795, %v2773
          %v2797 = vmul.f32 %v2796, %v2795
          %v2798 = vmul.f32 0.5, %v2797
          %v2799 = vsub.f32 1.5, %v2798
          %v2800 = vmul.f32 %v2795, %v2799
          %vm2801 = vweird.f32 %v2773
          %vm2802 = vweird.f32 %v2795
          %vm2803 = vmor %vm2801, %vm2802
          %v2804 = vsel %vm2803, %v2795, %v2800
          %v2805 = vrsqrt.pop %v2774
          %v2806 = vmul.f32 %v2805, %v2774
          %v2807 = vmul.f32 %v2806, %v2805
          %v2808 = vmul.f32 0.5, %v2807
          %v2809 = vsub.f32 1.5, %v2808
          %v2810 = vmul.f32 %v2805, %v2809
          %vm2811 = vweird.f32 %v2774
          %vm2812 = vweird.f32 %v2805
          %vm2813 = vmor %vm2811, %vm2812
          %v2814 = vsel %vm2813, %v2805, %v2810
          %v2815 = vmul.f32 %v2731, %v2784
          %v2816 = vmul.f32 %v2732, %v2794
          %v2817 = vmul.f32 %v2733, %v2804
          %v2818 = vmul.f32 %v2734, %v2814
          %v2819 = vld [vmem:[#allocation8] sm:$0xf]
          %v2821 = vperm.slane %v2819, 0
          %v2822 = vperm.slane %v2819, 1
          %v2823 = vperm.slane %v2819, 2
          %v2824 = vperm.slane %v2819, 3
          %v2829 = vmul.f32 %v2815, %v2821
          %v2830 = vmul.f32 %v2816, %v2822
          %v2831 = vmul.f32 %v2817, %v2823
          %v2832 = vmul.f32 %v2818, %v2824
          %v2833 = vld [vmem:[#allocation9] sm:$0xf]
          %v2835 = vperm.slane %v2833, 0
          %v2836 = vperm.slane %v2833, 1
          %v2837 = vperm.slane %v2833, 2
          %v2838 = vperm.slane %v2833, 3
          %v2843 = vadd.f32 %v2829, %v2835
          %v2844 = vadd.f32 %v2830, %v2836
          %v2845 = vadd.f32 %v2831, %v2837
          %v2846 = vadd.f32 %v2832, %v2838
          %v2847 = vmax.f32 %v2843, 0.0
          %v2848 = vmax.f32 %v2844, 0.0
          %v2849 = vmax.f32 %v2845, 0.0
          %v2850 = vmax.f32 %v2846, 0.0
          %v2851 = vld [vmem:[#allocation11] sm:$0xff]
          %v2852 = vld [vmem:[#allocation11 + $0x8] sm:$0xff]
          %v2853 = vld [vmem:[#allocation11 + $0x10] sm:$0xff]
          %v2854 = vld [vmem:[#allocation11 + $0x18] sm:$0xff]
          %v2855 = vld [vmem:[#allocation11 + $0x20] sm:$0xff]
          %v2856 = vld [vmem:[#allocation11 + $0x28] sm:$0xff]
          %v2857 = vld [vmem:[#allocation11 + $0x30] sm:$0xff]
          %v2858 = vld [vmem:[#allocation11 + $0x38] sm:$0xff]
          %v2859 = vld [vmem:[#allocation11 + $0x40] sm:$0xff]
          %v2860 = vld [vmem:[#allocation11 + $0x48] sm:$0xff]
          %v2861 = vld [vmem:[#allocation11 + $0x50] sm:$0xff]
          %v2862 = vld [vmem:[#allocation11 + $0x58] sm:$0xff]
          %v2863 = vld [vmem:[#allocation11 + $0x60] sm:$0xff]
          %v2864 = vld [vmem:[#allocation11 + $0x68] sm:$0xff]
          %v2865 = vld [vmem:[#allocation11 + $0x70] sm:$0xff]
          %v2866 = vld [vmem:[#allocation11 + $0x78] sm:$0xff]
          %v2867 = vld [vmem:[#allocation11 + $0x80] sm:$0xff]
          %v2868 = vld [vmem:[#allocation11 + $0x88] sm:$0xff]
          %v2869 = vld [vmem:[#allocation11 + $0x90] sm:$0xff]
          %v2870 = vld [vmem:[#allocation11 + $0x98] sm:$0xff]
          %v2871 = vld [vmem:[#allocation11 + $0xa0] sm:$0xff]
          %v2872 = vld [vmem:[#allocation11 + $0xa8] sm:$0xff]
          %v2873 = vld [vmem:[#allocation11 + $0xb0] sm:$0xff]
          %v2874 = vld [vmem:[#allocation11 + $0xb8] sm:$0xff]
          %v2875 = vld [vmem:[#allocation11 + $0xc0] sm:$0xff]
          %v2876 = vld [vmem:[#allocation11 + $0xc8] sm:$0xff]
          %v2877 = vld [vmem:[#allocation11 + $0xd0] sm:$0xff]
          %v2878 = vld [vmem:[#allocation11 + $0xd8] sm:$0xff]
          %v2879 = vld [vmem:[#allocation11 + $0xe0] sm:$0xff]
          %v2880 = vld [vmem:[#allocation11 + $0xe8] sm:$0xff]
          %v2881 = vld [vmem:[#allocation11 + $0xf0] sm:$0xff]
          %v2882 = vld [vmem:[#allocation11 + $0xf8] sm:$0xff]
          %v2883 = vld [vmem:[#allocation11 + $0x100] sm:$0xff]
          %v2884 = vld [vmem:[#allocation11 + $0x108] sm:$0xff]
          %v2885 = vld [vmem:[#allocation11 + $0x110] sm:$0xff]
          %v2886 = vld [vmem:[#allocation11 + $0x118] sm:$0xff]
          %v2887 = vld [vmem:[#allocation11 + $0x120] sm:$0xff]
          %v2888 = vld [vmem:[#allocation11 + $0x128] sm:$0xff]
          %v2889 = vld [vmem:[#allocation11 + $0x130] sm:$0xff]
          %v2890 = vld [vmem:[#allocation11 + $0x138] sm:$0xff]
          %v2891 = vld [vmem:[#allocation11 + $0x140] sm:$0xff]
          %v2892 = vld [vmem:[#allocation11 + $0x148] sm:$0xff]
          %v2893 = vld [vmem:[#allocation11 + $0x150] sm:$0xff]
          %v2894 = vld [vmem:[#allocation11 + $0x158] sm:$0xff]
          %v2895 = vld [vmem:[#allocation11 + $0x160] sm:$0xff]
          %v2896 = vld [vmem:[#allocation11 + $0x168] sm:$0xff]
          %v2897 = vld [vmem:[#allocation11 + $0x170] sm:$0xff]
          %v2898 = vld [vmem:[#allocation11 + $0x178] sm:$0xff]
          %v2899 = vld [vmem:[#allocation11 + $0x180] sm:$0xff]
          %v2900 = vld [vmem:[#allocation11 + $0x188] sm:$0xff]
          %v2901 = vld [vmem:[#allocation11 + $0x190] sm:$0xff]
          %v2902 = vld [vmem:[#allocation11 + $0x198] sm:$0xff]
          %v2903 = vld [vmem:[#allocation11 + $0x1a0] sm:$0xff]
          %v2904 = vld [vmem:[#allocation11 + $0x1a8] sm:$0xff]
          %v2905 = vld [vmem:[#allocation11 + $0x1b0] sm:$0xff]
          %v2906 = vld [vmem:[#allocation11 + $0x1b8] sm:$0xff]
          %v2907 = vld [vmem:[#allocation11 + $0x1c0] sm:$0xff]
          %v2908 = vld [vmem:[#allocation11 + $0x1c8] sm:$0xff]
          %v2909 = vld [vmem:[#allocation11 + $0x1d0] sm:$0xff]
          %v2910 = vld [vmem:[#allocation11 + $0x1d8] sm:$0xff]
          %v2911 = vld [vmem:[#allocation11 + $0x1e0] sm:$0xff]
          %v2912 = vld [vmem:[#allocation11 + $0x1e8] sm:$0xff]
          %v2913 = vld [vmem:[#allocation11 + $0x1f0] sm:$0xff]
          %v2914 = vld [vmem:[#allocation11 + $0x1f8] sm:$0xff]
          %v2915 = vld [vmem:[%s5] sm:$0x1]
          %v2917 = vperm.slane %v2915, 0
          %2919 = vmatpush.msra.mxu0 %v2866
          %2920 = vmatpush.msra.mxu0 %v2865
          %2921 = vmatpush.msra.mxu0 %v2864
          %2922 = vmatpush.msra.mxu0 %v2863
          %2923 = vmatpush.msra.mxu0 %v2862
          %2924 = vmatpush.msra.mxu0 %v2861
          %2925 = vmatpush.msra.mxu0 %v2860
          %2926 = vmatpush.msra.mxu0 %v2859
          %2927 = vmatpush.msra.mxu0 %v2858
          %2928 = vmatpush.msra.mxu0 %v2857
          %2929 = vmatpush.msra.mxu0 %v2856
          %2930 = vmatpush.msra.mxu0 %v2855
          %2931 = vmatpush.msra.mxu0 %v2854
          %2932 = vmatpush.msra.mxu0 %v2853
          %2933 = vmatpush.msra.mxu0 %v2852
          %2934 = vmatpush.msra.mxu0 %v2851
          %2935 = vmatmul.f32.gmra.mxu0 %v2847
          %v2936 = vpop.f32.mrf.mxu0
          %v2937 = vadd.f32 %v2917, %v2936
          %2938 = vdwg.mxu0
          %2939 = vmatpush.msra.mxu0 %v2882
          %2940 = vmatpush.msra.mxu0 %v2881
          %2941 = vmatpush.msra.mxu0 %v2880
          %2942 = vmatpush.msra.mxu0 %v2879
          %2943 = vmatpush.msra.mxu0 %v2878
          %2944 = vmatpush.msra.mxu0 %v2877
          %2945 = vmatpush.msra.mxu0 %v2876
          %2946 = vmatpush.msra.mxu0 %v2875
          %2947 = vmatpush.msra.mxu0 %v2874
          %2948 = vmatpush.msra.mxu0 %v2873
          %2949 = vmatpush.msra.mxu0 %v2872
          %2950 = vmatpush.msra.mxu0 %v2871
          %2951 = vmatpush.msra.mxu0 %v2870
          %2952 = vmatpush.msra.mxu0 %v2869
          %2953 = vmatpush.msra.mxu0 %v2868
          %2954 = vmatpush.msra.mxu0 %v2867
          %2955 = vmatmul.f32.gmra.mxu0 %v2848
          %v2956 = vpop.f32.mrf.mxu0
          %v2957 = vadd.f32 %v2937, %v2956
          %2958 = vdwg.mxu0
          %2959 = vmatpush.msra.mxu0 %v2898
          %2960 = vmatpush.msra.mxu0 %v2897
          %2961 = vmatpush.msra.mxu0 %v2896
          %2962 = vmatpush.msra.mxu0 %v2895
          %2963 = vmatpush.msra.mxu0 %v2894
          %2964 = vmatpush.msra.mxu0 %v2893
          %2965 = vmatpush.msra.mxu0 %v2892
          %2966 = vmatpush.msra.mxu0 %v2891
          %2967 = vmatpush.msra.mxu0 %v2890
          %2968 = vmatpush.msra.mxu0 %v2889
          %2969 = vmatpush.msra.mxu0 %v2888
          %2970 = vmatpush.msra.mxu0 %v2887
          %2971 = vmatpush.msra.mxu0 %v2886
          %2972 = vmatpush.msra.mxu0 %v2885
          %2973 = vmatpush.msra.mxu0 %v2884
          %2974 = vmatpush.msra.mxu0 %v2883
          %2975 = vmatmul.f32.gmra.mxu0 %v2849
          %v2976 = vpop.f32.mrf.mxu0
          %v2977 = vadd.f32 %v2957, %v2976
          %2978 = vdwg.mxu0
          %2979 = vmatpush.msra.mxu0 %v2914
          %2980 = vmatpush.msra.mxu0 %v2913
          %2981 = vmatpush.msra.mxu0 %v2912
          %2982 = vmatpush.msra.mxu0 %v2911
          %2983 = vmatpush.msra.mxu0 %v2910
          %2984 = vmatpush.msra.mxu0 %v2909
          %2985 = vmatpush.msra.mxu0 %v2908
          %2986 = vmatpush.msra.mxu0 %v2907
          %2987 = vmatpush.msra.mxu0 %v2906
          %2988 = vmatpush.msra.mxu0 %v2905
          %2989 = vmatpush.msra.mxu0 %v2904
          %2990 = vmatpush.msra.mxu0 %v2903
          %2991 = vmatpush.msra.mxu0 %v2902
          %2992 = vmatpush.msra.mxu0 %v2901
          %2993 = vmatpush.msra.mxu0 %v2900
          %2994 = vmatpush.msra.mxu0 %v2899
          %2995 = vmatmul.f32.gmra.mxu0 %v2850
          %v2996 = vpop.f32.mrf.mxu0
          %v2997 = vadd.f32 %v2977, %v2996
          %2998 = vdwg.mxu0
          %2999 = vst [vmem:[#allocation12] sm:$0xf] %v2997
        $region72: #{tpu_custom_call.1} parent=43 // pred_fallthru
          _
        // Predicated region
        $region73: #{tpu_custom_call.1} parent=43 // pred_check
          %p3000 = pneg %p167
        $region74: #{tpu_custom_call.1} parent=43 // pred_check_branch
          %3002 = sbr.rel (%p3000) target = $region76
        $region75: #{tpu_custom_call.1} parent=43 // pred_region
          %3004 = vsyncadd [#allocation5], 0
          %s3006 = sshll.u32 [#allocation12], 4
          %s3007 = int_to_ptr.vmem [resolvable:$true] %s3006
          %s3008 = sshll.u32 %s6, 4
          %s3009 = int_to_ptr.hbm [resolvable:$true] %s3008
          %3011 = dma.vmem_to_hbm [thread:$0]  %s3007, 64, %s3009, [#allocation5]
        $region76: #{tpu_custom_call.1} parent=43 // pred_fallthru
          _
        // Predicated region
        $region77: #{tpu_custom_call.1} parent=43 // pred_check
          %p3012 = pneg %p167
        $region78: #{tpu_custom_call.1} parent=43 // pred_check_branch
          %3014 = sbr.rel (%p3012) target = $region80
        $region79: #{tpu_custom_call.1} parent=43 // pred_region
          %3016 = dma.done [#allocation5], 64
        $region80: #{tpu_custom_call.1} parent=43 // pred_fallthru
          _
      $region44: #{tpu_custom_call.1} parent=5 // pred_fallthru
        _
      %p3017 = scmp.le.s32.totalorder 2, %s18
      // Predicated region
      $region81: #{tpu_custom_call.1} parent=5 // pred_check
        %p3018 = pneg %p3017
      $region82: #{tpu_custom_call.1} parent=5 // pred_check_branch
        %3020 = sbr.rel (%p3018) target = $region84
      $region83: #{tpu_custom_call.1} parent=5 // pred_region
        %s3021 = ssub.s32 %s18, 2
      $region84: #{tpu_custom_call.1} parent=5 // pred_fallthru
        _
    $region6: #{tpu_custom_call.1} parent=1 // loop_footer
      %s22 = sadd.s32 1, %s18
    $region7: #{tpu_custom_call.1} parent=1 // loop_footer_branch
      %17 = sbr.rel target = $region3
    $region8: #{tpu_custom_call.1} parent=1 // loop_exit
      _
    %3022 = vsyncpa [#allocation4], 1
    %s3023 = scalar_lea.sflag [#allocation4], 1
    %3024 = vsyncpa %s3023, 1
    %3025 = vsyncpa [#allocation7], 1
    %3026 = vsyncpa [#allocation10], 1
    %3027 = vsyncpa [#allocation5], 1
    %s3028 = scalar_lea.sflag [#allocation5], 1
    %3029 = vsyncpa %s3028, 1

</llo_original>
